<compile_context>
chip_gen: v7x
topology: tpu7x:2x2x1
jax: 0.10.0
libtpu: 0.0.40
codegen_flags: <defaults>
</compile_context>

<pallas_src>
import jax
import jax.numpy as jnp
from jax.experimental import pallas as pl
from jax.experimental.pallas import tpu as pltpu


# ----------------------------------------------------------------------------
# Precomputed lane-mixing weight matrices (tiny, built in plain JAX).
# Feature maps inside the kernel are 2D: rows = (image, h), lanes = w*C + c.
# ----------------------------------------------------------------------------
def _conv_lane_weight(w_oihw, w_in, stride):
    """(3, Win*Cin, Wout*Cout): per-kh lane-mixing matrix for a 3x3 pad=1 conv.

    Wmat[kh][wi*Cin + ci, wo*Cout + co] = W[co, ci, kh, wi - stride*wo + 1]
    (zero where kw falls outside [0, 3); width zero-padding is implicit)."""
    cout, cin = w_oihw.shape[0], w_oihw.shape[1]
    w_out = (w_in - 1) // stride + 1
    wi = jnp.arange(w_in)
    wo = jnp.arange(w_out)
    kw = wi[:, None] - stride * wo[None, :] + 1            # (Win, Wout)
    valid = (kw >= 0) & (kw < 3)
    kw_c = jnp.clip(kw, 0, 2)
    w_t = jnp.transpose(w_oihw, (2, 3, 1, 0))              # (kh, kw, Cin, Cout)
    taps = w_t[:, kw_c, :, :]                              # (3, Win, Wout, Cin, Cout)
    taps = jnp.where(valid[None, :, :, None, None], taps, 0.0)
    taps = jnp.transpose(taps, (0, 1, 3, 2, 4))            # (3, Win, Cin, Wout, Cout)
    return taps.reshape(3, w_in * cin, w_out * cout)


def _convT_lane_weight(w_iokk, w_in):
    """(2, Win*Cin, 2*Win*Cout): per-dh lane matrix for ConvTranspose k=2 s=2.

    WmatT[dh][j*Cin + ci, (2j + dw)*Cout + co] = W[ci, co, dh, dw]."""
    cin, cout = w_iokk.shape[0], w_iokk.shape[1]
    eye = jnp.eye(w_in, dtype=jnp.float32)
    w_t = jnp.transpose(w_iokk, (2, 3, 0, 1))              # (dh, dw, Cin, Cout)
    t = jnp.einsum("jJ,dwio->djiJwo", eye, w_t)            # (2, Wi, Cin, Wi, 2, Cout)
    return t.reshape(2, w_in * cin, 2 * w_in * cout)


def _bias_lanes(b, w_out):
    return jnp.tile(b, w_out)[None, :].astype(jnp.float32)  # (1, Wout*Cout)


def _const_spec(a):
    zeros = (0,) * a.ndim
    return pl.BlockSpec(a.shape, lambda i, _z=zeros: _z)


# ----------------------------------------------------------------------------
# Fused kernel: whole 6-layer forward for one chunk of row-stacked images.
# ----------------------------------------------------------------------------
def _make_kernel(ipb, h, h2, h4, compute_dtype):
    R, R2, R4 = ipb * h, ipb * h2, ipb * h4
    cdt = compute_dtype

    def kernel(x_ref,
               wm0, b0, wm1, b1, wt2, b2, wm3, b3, wm4, b4, wm5, b5,
               illu_ref, illu1_ref, illu2_ref, illu3_ref):

        def mm(a, w):
            return jnp.dot(a, w, preferred_element_type=jnp.float32)

        def leaky(y):                       # LeakyReLU(0.2)
            return jnp.maximum(y, 0.2 * y)

        def first_mask(rows, per_h):        # 0 on the first row of each image
            r = jax.lax.broadcasted_iota(jnp.int32, (rows, 1), 0)
            return (r % per_h != 0).astype(cdt)

        def last_mask(rows, per_h):         # 0 on the last row of each image
            r = jax.lax.broadcasted_iota(jnp.int32, (rows, 1), 0)
            return (r % per_h != per_h - 1).astype(cdt)

        def down1(v, m):                    # out[r] = v[r-1], boundary rows zeroed
            return jnp.roll(v, 1, axis=0) * m

        def up1(v, m):                      # out[r] = v[r+1], boundary rows zeroed
            return jnp.roll(v, -1, axis=0) * m

        mF_h2, mL_h2 = first_mask(R2, h2), last_mask(R2, h2)
        mF_h, mL_h = first_mask(R, h), last_mask(R, h)
        mF_h4 = first_mask(R4, h4)

        # ---- model[0]: 3x3 conv 3->C, stride 2 (rows via strided loads of x)
        x_e = x_ref[pl.ds(0, R2, stride=2), :].astype(cdt)   # rows 2r   -> kh=1
        x_o = x_ref[pl.ds(1, R2, stride=2), :].astype(cdt)   # rows 2r+1 -> kh=2
        x_m = down1(x_o, mF_h2)                              # rows 2r-1 -> kh=0
        hact = leaky(mm(x_m, wm0[0]) + mm(x_e, wm0[1]) + mm(x_o, wm0[2]) + b0[...])

        # ---- model[2]: 3x3 conv C->C, stride 1
        hb = hact.astype(cdt)
        hact = leaky(mm(down1(hb, mF_h2), wm1[0]) + mm(hb, wm1[1])
                     + mm(up1(hb, mL_h2), wm1[2]) + b1[...])

        # ---- model[4]: ConvTranspose C->3, k=2 s=2:
        #      lane matmul per dh + row interleave via two strided stores.
        hb = hact.astype(cdt)
        t0 = leaky(mm(hb, wt2[0]) + b2[...])                 # output rows 2r
        t1 = leaky(mm(hb, wt2[1]) + b2[...])                 # output rows 2r+1
        illu_ref[pl.ds(0, R2, stride=2), :] = t0.astype(illu_ref.dtype)
        illu_ref[pl.ds(1, R2, stride=2), :] = t1.astype(illu_ref.dtype)

        # ---- conv0: 3x3 conv 3->C, stride 1 (illu read back from its own ref)
        illu = illu_ref[...].astype(cdt)
        illu1 = leaky(mm(down1(illu, mF_h), wm3[0]) + mm(illu, wm3[1])
                      + mm(up1(illu, mL_h), wm3[2]) + b3[...])
        illu1_ref[...] = illu1.astype(illu1_ref.dtype)

        # ---- conv1: 3x3 conv C->2C, stride 2 (strided readback of illu1)
        a_e = illu1_ref[pl.ds(0, R2, stride=2), :].astype(cdt)
        a_o = illu1_ref[pl.ds(1, R2, stride=2), :].astype(cdt)
        a_m = down1(a_o, mF_h2)
        illu2 = leaky(mm(a_m, wm4[0]) + mm(a_e, wm4[1]) + mm(a_o, wm4[2]) + b4[...])
        illu2_ref[...] = illu2.astype(illu2_ref.dtype)

        # ---- conv2: 3x3 conv 2C->4C, stride 2 (strided readback of illu2)
        c_e = illu2_ref[pl.ds(0, R4, stride=2), :].astype(cdt)
        c_o = illu2_ref[pl.ds(1, R4, stride=2), :].astype(cdt)
        c_m = down1(c_o, mF_h4)
        illu3 = leaky(mm(c_m, wm5[0]) + mm(c_e, wm5[1]) + mm(c_o, wm5[2]) + b5[...])
        illu3_ref[...] = illu3.astype(illu3_ref.dtype)

    return kernel


# ----------------------------------------------------------------------------
# Forward wrapper (PyTorch module semantics: NCHW in / NCHW out)
# ----------------------------------------------------------------------------
def init_params(channels, key):
    C = channels
    ks = jax.random.split(key, 12)
    n = lambda k, s, scale=0.1: scale * jax.random.normal(k, s, jnp.float32)
    return {
        "m0_w": n(ks[0], (C, 3, 3, 3)),          "m0_b": n(ks[1], (C,), 0.01),
        "m2_w": n(ks[2], (C, C, 3, 3)),          "m2_b": n(ks[3], (C,), 0.01),
        "m4_w": n(ks[4], (C, 3, 2, 2)),          "m4_b": n(ks[5], (3,), 0.01),
        "c0_w": n(ks[6], (C, 3, 3, 3)),          "c0_b": n(ks[7], (C,), 0.01),
        "c1_w": n(ks[8], (2 * C, C, 3, 3)),      "c1_b": n(ks[9], (2 * C,), 0.01),
        "c2_w": n(ks[10], (4 * C, 2 * C, 3, 3)), "c2_b": n(ks[11], (4 * C,), 0.01),
    }


_TARGET_ROWS = 256   # aim for ~256 sublane rows (MXU M dim) per grid step


@jax.jit
def illu_generator_forward(params, x_nchw):
    N, cin0, H, W = x_nchw.shape
    assert cin0 == 3 and H % 4 == 0 and W % 4 == 0
    C = params["m0_w"].shape[0]
    H2, W2, H4, W4 = H // 2, W // 2, H // 4, W // 4

    # Images per grid step: row-stack the batch so each dot has ~_TARGET_ROWS
    # rows (amortises per-step overhead on v5e/v6e; larger batches still give
    # multiple steps -> pipelining and both v7x TensorCores).
    ipb = max(1, min(N, max(1, _TARGET_ROWS // H)))
    while N % ipb != 0:
        ipb -= 1
    chunks = N // ipb
    R, R2, R4 = ipb * H, ipb * H2, ipb * H4

    # NCHW -> row-stacked lane-packed 2D: (N*H, W*3), row = n*H + h, lane = w*3 + c
    x2d = jnp.transpose(x_nchw, (0, 2, 3, 1)).reshape(N * H, W * 3)

    wdt = jnp.bfloat16   # bf16 matmul operands, f32 accumulation in-kernel
    consts = [
        _conv_lane_weight(params["m0_w"], W, 2).astype(wdt), _bias_lanes(params["m0_b"], W2),
        _conv_lane_weight(params["m2_w"], W2, 1).astype(wdt), _bias_lanes(params["m2_b"], W2),
        _convT_lane_weight(params["m4_w"], W2).astype(wdt),   _bias_lanes(params["m4_b"], W),
        _conv_lane_weight(params["c0_w"], W, 1).astype(wdt), _bias_lanes(params["c0_b"], W),
        _conv_lane_weight(params["c1_w"], W, 2).astype(wdt), _bias_lanes(params["c1_b"], W2),
        _conv_lane_weight(params["c2_w"], W2, 2).astype(wdt), _bias_lanes(params["c2_b"], W4),
    ]

    out_shape = (
        jax.ShapeDtypeStruct((N * H, W * 3), jnp.float32),          # illu
        jax.ShapeDtypeStruct((N * H, W * C), jnp.float32),          # illu1
        jax.ShapeDtypeStruct((N * H2, W2 * 2 * C), jnp.float32),    # illu2
        jax.ShapeDtypeStruct((N * H4, W4 * 4 * C), jnp.float32),    # illu3
    )

    in_specs = [pl.BlockSpec((R, W * 3), lambda i: (i, 0))]
    in_specs += [_const_spec(c) for c in consts]
    out_specs = (
        pl.BlockSpec((R, W * 3), lambda i: (i, 0)),
        pl.BlockSpec((R, W * C), lambda i: (i, 0)),
        pl.BlockSpec((R2, W2 * 2 * C), lambda i: (i, 0)),
        pl.BlockSpec((R4, W4 * 4 * C), lambda i: (i, 0)),
    )

    # Advisory cost estimate (lane-mixing matmuls only; row selection is free).
    def _fl(rows, k, n_l, taps):
        return 2 * rows * k * n_l * taps
    flops = chunks * (_fl(R2, W * 3, W2 * C, 3) + _fl(R2, W2 * C, W2 * C, 3)
                      + _fl(R2, W2 * C, W * 3, 2) + _fl(R, W * 3, W * C, 3)
                      + _fl(R2, W * C, W2 * 2 * C, 3) + _fl(R4, W2 * 2 * C, W4 * 4 * C, 3))
    const_bytes = sum(int(c.size) * c.dtype.itemsize for c in consts)
    io_bytes = 4 * (N * H * W * 3 * 2 + N * H * W * C
                    + N * H2 * W2 * 2 * C + N * H4 * W4 * 4 * C)
    bytes_accessed = io_bytes + chunks * const_bytes

    vmem_limit = int(min(100 * 2 ** 20,
                         max(32 * 2 ** 20, 4 * (const_bytes + io_bytes // max(chunks, 1)))))

    kernel = _make_kernel(ipb, H, H2, H4, wdt)

    outs = pl.pallas_call(
        kernel,
        out_shape=out_shape,
        grid=(chunks,),
        in_specs=in_specs,
        out_specs=out_specs,
        compiler_params=pltpu.CompilerParams(
            dimension_semantics=("parallel",),
            vmem_limit_bytes=vmem_limit),
        cost_estimate=pl.CostEstimate(flops=int(flops), transcendentals=0,
                                      bytes_accessed=int(bytes_accessed)),
    )(x2d, *consts)

    illu2d, illu1_2d, illu2_2d, illu3_2d = outs

    def to_nchw(y2d, h, w, c):
        return jnp.transpose(y2d.reshape(N, h, w, c), (0, 3, 1, 2))

    return (to_nchw(illu2d, H, W, 3),
            [to_nchw(illu1_2d, H, W, C),
             to_nchw(illu2_2d, H2, W2, 2 * C),
             to_nchw(illu3_2d, H4, W4, 4 * C)])


# ----------------------------------------------------------------------------
# Pure-JAX reference (correctness check)
# ----------------------------------------------------------------------------
def _lrelu(x):
    return jnp.where(x >= 0, x, 0.2 * x)


def _conv_ref(x, w_oihw, b, stride):
    w_hwio = jnp.transpose(w_oihw, (2, 3, 1, 0))
    y = jax.lax.conv_general_dilated(
        x, w_hwio, (stride, stride), ((1, 1), (1, 1)),
        dimension_numbers=("NHWC", "HWIO", "NHWC"))
    return _lrelu(y + b)


def _convT_ref(x, w_iokk, b):
    N, Hi, Wi, _ = x.shape
    Cout = w_iokk.shape[1]
    y = jnp.einsum("nhwi,iodk->nhwdko", x, w_iokk)
    y = jnp.transpose(y, (0, 1, 3, 2, 4, 5)).reshape(N, 2 * Hi, 2 * Wi, Cout)
    return _lrelu(y + b)


def reference_forward(params, x_nchw):
    x = jnp.transpose(x_nchw, (0, 2, 3, 1))
    h = _conv_ref(x, params["m0_w"], params["m0_b"], 2)
    h = _conv_ref(h, params["m2_w"], params["m2_b"], 1)
    illu = _convT_ref(h, params["m4_w"], params["m4_b"])
    illu1 = _conv_ref(illu, params["c0_w"], params["c0_b"], 1)
    illu2 = _conv_ref(illu1, params["c1_w"], params["c1_b"], 2)
    illu3 = _conv_ref(illu2, params["c2_w"], params["c2_b"], 2)
    to_nchw = lambda t: jnp.transpose(t, (0, 3, 1, 2))
    return to_nchw(illu), [to_nchw(illu1), to_nchw(illu2), to_nchw(illu3)]


if __name__ == "__main__":
    key = jax.random.PRNGKey(0)
    k_x, k_p = jax.random.split(key)
    channels = 4
    x = jax.random.normal(k_x, (2, 3, 16, 16), jnp.float32)   # NCHW like PyTorch
    params = init_params(channels, k_p)

    illu, (illu1, illu2, illu3) = illu_generator_forward(params, x)
    jax.block_until_ready((illu, illu1, illu2, illu3))

    # shape checks (PyTorch semantics)
    assert illu.shape == (2, 3, 16, 16)
    assert illu1.shape == (2, channels, 16, 16)
    assert illu2.shape == (2, 2 * channels, 8, 8)
    assert illu3.shape == (2, 4 * channels, 4, 4)

    # numerical check against a pure-JAX reference (bf16 matmul operands with
    # f32 accumulation in the kernel -> allow a few e-3 of deviation)
    r_illu, (r1, r2, r3) = reference_forward(params, x)
    for a, b in ((illu, r_illu), (illu1, r1), (illu2, r2), (illu3, r3)):
        err = float(jnp.max(jnp.abs(a - b)))
        assert jnp.allclose(a, b, rtol=2e-2, atol=2e-2), err

    print("KERNEL_OK")
</pallas_src>

<mosaic_0001>
module attributes {stable_mosaic.version = 11 : i64} {
  func.func @kernel(%arg0: i32, %arg1: memref<32x48xf32, #tpu.memory_space<vmem>>, %arg2: memref<3x48x32xbf16, #tpu.memory_space<vmem>>, %arg3: memref<1x32xf32, #tpu.memory_space<vmem>>, %arg4: memref<3x32x32xbf16, #tpu.memory_space<vmem>>, %arg5: memref<1x32xf32, #tpu.memory_space<vmem>>, %arg6: memref<2x32x48xbf16, #tpu.memory_space<vmem>>, %arg7: memref<1x48xf32, #tpu.memory_space<vmem>>, %arg8: memref<3x48x64xbf16, #tpu.memory_space<vmem>>, %arg9: memref<1x64xf32, #tpu.memory_space<vmem>>, %arg10: memref<3x64x64xbf16, #tpu.memory_space<vmem>>, %arg11: memref<1x64xf32, #tpu.memory_space<vmem>>, %arg12: memref<3x64x64xbf16, #tpu.memory_space<vmem>>, %arg13: memref<1x64xf32, #tpu.memory_space<vmem>>, %arg14: memref<32x48xf32, #tpu.memory_space<vmem>>, %arg15: memref<32x64xf32, #tpu.memory_space<vmem>>, %arg16: memref<16x64xf32, #tpu.memory_space<vmem>>, %arg17: memref<8x64xf32, #tpu.memory_space<vmem>>) attributes {dimension_semantics = [#tpu.dimension_semantics<parallel>], iteration_bounds = array<i64: 1>, scalar_prefetch = 0 : i64, scratch_operands = 0 : i64, tpu.core_type = #tpu.core_type<tc>, window_params = [{transform_indices = @transform_0, window_bounds = array<i64: 32, 48>}, {pipeline_mode = #tpu.pipeline_mode<synchronous>, transform_indices = @transform_1, window_bounds = array<i64: 3, 48, 32>}, {pipeline_mode = #tpu.pipeline_mode<synchronous>, transform_indices = @transform_2, window_bounds = array<i64: 1, 32>}, {pipeline_mode = #tpu.pipeline_mode<synchronous>, transform_indices = @transform_3, window_bounds = array<i64: 3, 32, 32>}, {pipeline_mode = #tpu.pipeline_mode<synchronous>, transform_indices = @transform_4, window_bounds = array<i64: 1, 32>}, {pipeline_mode = #tpu.pipeline_mode<synchronous>, transform_indices = @transform_5, window_bounds = array<i64: 2, 32, 48>}, {pipeline_mode = #tpu.pipeline_mode<synchronous>, transform_indices = @transform_6, window_bounds = array<i64: 1, 48>}, {pipeline_mode = #tpu.pipeline_mode<synchronous>, transform_indices = @transform_7, window_bounds = array<i64: 3, 48, 64>}, {pipeline_mode = #tpu.pipeline_mode<synchronous>, transform_indices = @transform_8, window_bounds = array<i64: 1, 64>}, {pipeline_mode = #tpu.pipeline_mode<synchronous>, transform_indices = @transform_9, window_bounds = array<i64: 3, 64, 64>}, {pipeline_mode = #tpu.pipeline_mode<synchronous>, transform_indices = @transform_10, window_bounds = array<i64: 1, 64>}, {pipeline_mode = #tpu.pipeline_mode<synchronous>, transform_indices = @transform_11, window_bounds = array<i64: 3, 64, 64>}, {pipeline_mode = #tpu.pipeline_mode<synchronous>, transform_indices = @transform_12, window_bounds = array<i64: 1, 64>}, {transform_indices = @transform_13, window_bounds = array<i64: 32, 48>}, {transform_indices = @transform_14, window_bounds = array<i64: 32, 64>}, {transform_indices = @transform_15, window_bounds = array<i64: 16, 64>}, {transform_indices = @transform_16, window_bounds = array<i64: 8, 64>}]} {
    %0 = tpu.iota {dimensions = array<i32: 0>} : vector<16x1xi32>
    %c8_i32 = arith.constant 8 : i32
    %c0_i32 = arith.constant 0 : i32
    %1 = arith.cmpi eq, %c8_i32, %c0_i32 : i32
    %c1_i32 = arith.constant 1 : i32
    %2 = arith.select %1, %c1_i32, %c8_i32 : i32
    %3 = vector.broadcast %2 : i32 to vector<16x1xi32>
    %4 = arith.remsi %0, %3 : vector<16x1xi32>
    %c0_i32_0 = arith.constant 0 : i32
    %5 = vector.broadcast %c0_i32_0 : i32 to vector<16x1xi32>
    %6 = arith.cmpi ne, %4, %5 : vector<16x1xi32>
    %c0_i32_1 = arith.constant 0 : i32
    %7 = vector.broadcast %c0_i32_1 : i32 to vector<16x1xi32>
    %8 = arith.cmpi slt, %4, %7 : vector<16x1xi32>
    %c0_i32_2 = arith.constant 0 : i32
    %9 = arith.cmpi slt, %2, %c0_i32_2 : i32
    %10 = vector.broadcast %9 : i1 to vector<16x1xi1>
    %11 = vector.broadcast %10 : vector<16x1xi1> to vector<16x1xi1>
    %12 = arith.xori %8, %11 : vector<16x1xi1>
    %13 = arith.andi %12, %6 : vector<16x1xi1>
    %14 = vector.broadcast %2 : i32 to vector<16x1xi32>
    %15 = arith.addi %4, %14 : vector<16x1xi32>
    %16 = arith.select %13, %15, %4 : vector<16x1xi1>, vector<16x1xi32>
    %c0_i32_3 = arith.constant 0 : i32
    %17 = vector.broadcast %c0_i32_3 : i32 to vector<16x1xi32>
    %18 = arith.cmpi ne, %16, %17 : vector<16x1xi32>
    %19 = arith.extui %18 : vector<16x1xi1> to vector<16x1xi32>
    %20 = arith.sitofp %19 : vector<16x1xi32> to vector<16x1xf32>
    %21 = arith.truncf %20 : vector<16x1xf32> to vector<16x1xbf16>
    %22 = tpu.iota {dimensions = array<i32: 0>} : vector<16x1xi32>
    %c8_i32_4 = arith.constant 8 : i32
    %c0_i32_5 = arith.constant 0 : i32
    %23 = arith.cmpi eq, %c8_i32_4, %c0_i32_5 : i32
    %c1_i32_6 = arith.constant 1 : i32
    %24 = arith.select %23, %c1_i32_6, %c8_i32_4 : i32
    %25 = vector.broadcast %24 : i32 to vector<16x1xi32>
    %26 = arith.remsi %22, %25 : vector<16x1xi32>
    %c0_i32_7 = arith.constant 0 : i32
    %27 = vector.broadcast %c0_i32_7 : i32 to vector<16x1xi32>
    %28 = arith.cmpi ne, %26, %27 : vector<16x1xi32>
    %c0_i32_8 = arith.constant 0 : i32
    %29 = vector.broadcast %c0_i32_8 : i32 to vector<16x1xi32>
    %30 = arith.cmpi slt, %26, %29 : vector<16x1xi32>
    %c0_i32_9 = arith.constant 0 : i32
    %31 = arith.cmpi slt, %24, %c0_i32_9 : i32
    %32 = vector.broadcast %31 : i1 to vector<16x1xi1>
    %33 = vector.broadcast %32 : vector<16x1xi1> to vector<16x1xi1>
    %34 = arith.xori %30, %33 : vector<16x1xi1>
    %35 = arith.andi %34, %28 : vector<16x1xi1>
    %36 = vector.broadcast %24 : i32 to vector<16x1xi32>
    %37 = arith.addi %26, %36 : vector<16x1xi32>
    %38 = arith.select %35, %37, %26 : vector<16x1xi1>, vector<16x1xi32>
    %c7_i32 = arith.constant 7 : i32
    %39 = vector.broadcast %c7_i32 : i32 to vector<16x1xi32>
    %40 = arith.cmpi ne, %38, %39 : vector<16x1xi32>
    %41 = arith.extui %40 : vector<16x1xi1> to vector<16x1xi32>
    %42 = arith.sitofp %41 : vector<16x1xi32> to vector<16x1xf32>
    %43 = arith.truncf %42 : vector<16x1xf32> to vector<16x1xbf16>
    %44 = tpu.iota {dimensions = array<i32: 0>} : vector<32x1xi32>
    %c16_i32 = arith.constant 16 : i32
    %c0_i32_10 = arith.constant 0 : i32
    %45 = arith.cmpi eq, %c16_i32, %c0_i32_10 : i32
    %c1_i32_11 = arith.constant 1 : i32
    %46 = arith.select %45, %c1_i32_11, %c16_i32 : i32
    %47 = vector.broadcast %46 : i32 to vector<32x1xi32>
    %48 = arith.remsi %44, %47 : vector<32x1xi32>
    %c0_i32_12 = arith.constant 0 : i32
    %49 = vector.broadcast %c0_i32_12 : i32 to vector<32x1xi32>
    %50 = arith.cmpi ne, %48, %49 : vector<32x1xi32>
    %c0_i32_13 = arith.constant 0 : i32
    %51 = vector.broadcast %c0_i32_13 : i32 to vector<32x1xi32>
    %52 = arith.cmpi slt, %48, %51 : vector<32x1xi32>
    %c0_i32_14 = arith.constant 0 : i32
    %53 = arith.cmpi slt, %46, %c0_i32_14 : i32
    %54 = vector.broadcast %53 : i1 to vector<32x1xi1>
    %55 = vector.broadcast %54 : vector<32x1xi1> to vector<32x1xi1>
    %56 = arith.xori %52, %55 : vector<32x1xi1>
    %57 = arith.andi %56, %50 : vector<32x1xi1>
    %58 = vector.broadcast %46 : i32 to vector<32x1xi32>
    %59 = arith.addi %48, %58 : vector<32x1xi32>
    %60 = arith.select %57, %59, %48 : vector<32x1xi1>, vector<32x1xi32>
    %c0_i32_15 = arith.constant 0 : i32
    %61 = vector.broadcast %c0_i32_15 : i32 to vector<32x1xi32>
    %62 = arith.cmpi ne, %60, %61 : vector<32x1xi32>
    %63 = arith.extui %62 : vector<32x1xi1> to vector<32x1xi32>
    %64 = arith.sitofp %63 : vector<32x1xi32> to vector<32x1xf32>
    %65 = arith.truncf %64 : vector<32x1xf32> to vector<32x1xbf16>
    %66 = tpu.iota {dimensions = array<i32: 0>} : vector<32x1xi32>
    %c16_i32_16 = arith.constant 16 : i32
    %c0_i32_17 = arith.constant 0 : i32
    %67 = arith.cmpi eq, %c16_i32_16, %c0_i32_17 : i32
    %c1_i32_18 = arith.constant 1 : i32
    %68 = arith.select %67, %c1_i32_18, %c16_i32_16 : i32
    %69 = vector.broadcast %68 : i32 to vector<32x1xi32>
    %70 = arith.remsi %66, %69 : vector<32x1xi32>
    %c0_i32_19 = arith.constant 0 : i32
    %71 = vector.broadcast %c0_i32_19 : i32 to vector<32x1xi32>
    %72 = arith.cmpi ne, %70, %71 : vector<32x1xi32>
    %c0_i32_20 = arith.constant 0 : i32
    %73 = vector.broadcast %c0_i32_20 : i32 to vector<32x1xi32>
    %74 = arith.cmpi slt, %70, %73 : vector<32x1xi32>
    %c0_i32_21 = arith.constant 0 : i32
    %75 = arith.cmpi slt, %68, %c0_i32_21 : i32
    %76 = vector.broadcast %75 : i1 to vector<32x1xi1>
    %77 = vector.broadcast %76 : vector<32x1xi1> to vector<32x1xi1>
    %78 = arith.xori %74, %77 : vector<32x1xi1>
    %79 = arith.andi %78, %72 : vector<32x1xi1>
    %80 = vector.broadcast %68 : i32 to vector<32x1xi32>
    %81 = arith.addi %70, %80 : vector<32x1xi32>
    %82 = arith.select %79, %81, %70 : vector<32x1xi1>, vector<32x1xi32>
    %c15_i32 = arith.constant 15 : i32
    %83 = vector.broadcast %c15_i32 : i32 to vector<32x1xi32>
    %84 = arith.cmpi ne, %82, %83 : vector<32x1xi32>
    %85 = arith.extui %84 : vector<32x1xi1> to vector<32x1xi32>
    %86 = arith.sitofp %85 : vector<32x1xi32> to vector<32x1xf32>
    %87 = arith.truncf %86 : vector<32x1xf32> to vector<32x1xbf16>
    %88 = tpu.iota {dimensions = array<i32: 0>} : vector<8x1xi32>
    %c4_i32 = arith.constant 4 : i32
    %c0_i32_22 = arith.constant 0 : i32
    %89 = arith.cmpi eq, %c4_i32, %c0_i32_22 : i32
    %c1_i32_23 = arith.constant 1 : i32
    %90 = arith.select %89, %c1_i32_23, %c4_i32 : i32
    %91 = vector.broadcast %90 : i32 to vector<8x1xi32>
    %92 = arith.remsi %88, %91 : vector<8x1xi32>
    %c0_i32_24 = arith.constant 0 : i32
    %93 = vector.broadcast %c0_i32_24 : i32 to vector<8x1xi32>
    %94 = arith.cmpi ne, %92, %93 : vector<8x1xi32>
    %c0_i32_25 = arith.constant 0 : i32
    %95 = vector.broadcast %c0_i32_25 : i32 to vector<8x1xi32>
    %96 = arith.cmpi slt, %92, %95 : vector<8x1xi32>
    %c0_i32_26 = arith.constant 0 : i32
    %97 = arith.cmpi slt, %90, %c0_i32_26 : i32
    %98 = vector.broadcast %97 : i1 to vector<8x1xi1>
    %99 = vector.broadcast %98 : vector<8x1xi1> to vector<8x1xi1>
    %100 = arith.xori %96, %99 : vector<8x1xi1>
    %101 = arith.andi %100, %94 : vector<8x1xi1>
    %102 = vector.broadcast %90 : i32 to vector<8x1xi32>
    %103 = arith.addi %92, %102 : vector<8x1xi32>
    %104 = arith.select %101, %103, %92 : vector<8x1xi1>, vector<8x1xi32>
    %c0_i32_27 = arith.constant 0 : i32
    %105 = vector.broadcast %c0_i32_27 : i32 to vector<8x1xi32>
    %106 = arith.cmpi ne, %104, %105 : vector<8x1xi32>
    %107 = arith.extui %106 : vector<8x1xi1> to vector<8x1xi32>
    %108 = arith.sitofp %107 : vector<8x1xi32> to vector<8x1xf32>
    %109 = arith.truncf %108 : vector<8x1xf32> to vector<8x1xbf16>
    %c0 = arith.constant 0 : index
    %c0_28 = arith.constant 0 : index
    %110 = tpu.strided_load %arg1[%c0, %c0_28] {strides = array<i32: 2, 1>} : memref<32x48xf32, #tpu.memory_space<vmem>>, vector<16x48xf32>
    %111 = arith.truncf %110 : vector<16x48xf32> to vector<16x48xbf16>
    %c1 = arith.constant 1 : index
    %c0_29 = arith.constant 0 : index
    %112 = tpu.strided_load %arg1[%c1, %c0_29] {strides = array<i32: 2, 1>} : memref<32x48xf32, #tpu.memory_space<vmem>>, vector<16x48xf32>
    %113 = arith.truncf %112 : vector<16x48xf32> to vector<16x48xbf16>
    %114 = vector.extract_strided_slice %113 {offsets = [15, 0], sizes = [1, 48], strides = [1, 1]} : vector<16x48xbf16> to vector<1x48xbf16>
    %115 = vector.extract_strided_slice %113 {offsets = [0, 0], sizes = [15, 48], strides = [1, 1]} : vector<16x48xbf16> to vector<15x48xbf16>
    %116 = tpu.concatenate %114, %115 in 0 : vector<1x48xbf16>, vector<15x48xbf16> -> vector<16x48xbf16>
    %117 = vector.broadcast %21 : vector<16x1xbf16> to vector<16x48xbf16>
    %118 = arith.mulf %116, %117 : vector<16x48xbf16>
    %c0_30 = arith.constant 0 : index
    %c0_31 = arith.constant 0 : index
    %c0_32 = arith.constant 0 : index
    %119 = vector.load %arg2[%c0_30, %c0_31, %c0_32] : memref<3x48x32xbf16, #tpu.memory_space<vmem>>, vector<1x48x32xbf16>
    %120 = vector.shape_cast %119 : vector<1x48x32xbf16> to vector<48x32xbf16>
    %cst = arith.constant dense<0.000000e+00> : vector<16x32xf32>
    %121 = tpu.matmul %118, %120, %cst {dimension_numbers = #tpu.dot_dimension_numbers<[1], [0], [0], [1], [0, 0, 1, 1], [], []>} : vector<16x48xbf16>, vector<48x32xbf16>, vector<16x32xf32> -> vector<16x32xf32>
    %c1_33 = arith.constant 1 : index
    %c0_34 = arith.constant 0 : index
    %c0_35 = arith.constant 0 : index
    %122 = vector.load %arg2[%c1_33, %c0_34, %c0_35] : memref<3x48x32xbf16, #tpu.memory_space<vmem>>, vector<1x48x32xbf16>
    %123 = vector.shape_cast %122 : vector<1x48x32xbf16> to vector<48x32xbf16>
    %cst_36 = arith.constant dense<0.000000e+00> : vector<16x32xf32>
    %124 = tpu.matmul %111, %123, %cst_36 {dimension_numbers = #tpu.dot_dimension_numbers<[1], [0], [0], [1], [0, 0, 1, 1], [], []>} : vector<16x48xbf16>, vector<48x32xbf16>, vector<16x32xf32> -> vector<16x32xf32>
    %125 = arith.addf %121, %124 : vector<16x32xf32>
    %c2 = arith.constant 2 : index
    %c0_37 = arith.constant 0 : index
    %c0_38 = arith.constant 0 : index
    %126 = vector.load %arg2[%c2, %c0_37, %c0_38] : memref<3x48x32xbf16, #tpu.memory_space<vmem>>, vector<1x48x32xbf16>
    %127 = vector.shape_cast %126 : vector<1x48x32xbf16> to vector<48x32xbf16>
    %cst_39 = arith.constant dense<0.000000e+00> : vector<16x32xf32>
    %128 = tpu.matmul %113, %127, %cst_39 {dimension_numbers = #tpu.dot_dimension_numbers<[1], [0], [0], [1], [0, 0, 1, 1], [], []>} : vector<16x48xbf16>, vector<48x32xbf16>, vector<16x32xf32> -> vector<16x32xf32>
    %129 = arith.addf %125, %128 : vector<16x32xf32>
    %c0_40 = arith.constant 0 : index
    %c0_41 = arith.constant 0 : index
    %130 = vector.load %arg3[%c0_40, %c0_41] : memref<1x32xf32, #tpu.memory_space<vmem>>, vector<1x32xf32>
    %131 = vector.broadcast %130 : vector<1x32xf32> to vector<16x32xf32>
    %132 = arith.addf %129, %131 : vector<16x32xf32>
    %cst_42 = arith.constant 2.000000e-01 : f32
    %133 = vector.broadcast %cst_42 : f32 to vector<16x32xf32>
    %134 = arith.mulf %133, %132 : vector<16x32xf32>
    %135 = arith.maximumf %132, %134 : vector<16x32xf32>
    %136 = arith.truncf %135 : vector<16x32xf32> to vector<16x32xbf16>
    %137 = vector.extract_strided_slice %136 {offsets = [15, 0], sizes = [1, 32], strides = [1, 1]} : vector<16x32xbf16> to vector<1x32xbf16>
    %138 = vector.extract_strided_slice %136 {offsets = [0, 0], sizes = [15, 32], strides = [1, 1]} : vector<16x32xbf16> to vector<15x32xbf16>
    %139 = tpu.concatenate %137, %138 in 0 : vector<1x32xbf16>, vector<15x32xbf16> -> vector<16x32xbf16>
    %140 = vector.broadcast %21 : vector<16x1xbf16> to vector<16x32xbf16>
    %141 = arith.mulf %139, %140 : vector<16x32xbf16>
    %c0_43 = arith.constant 0 : index
    %c0_44 = arith.constant 0 : index
    %c0_45 = arith.constant 0 : index
    %142 = vector.load %arg4[%c0_43, %c0_44, %c0_45] : memref<3x32x32xbf16, #tpu.memory_space<vmem>>, vector<1x32x32xbf16>
    %143 = vector.shape_cast %142 : vector<1x32x32xbf16> to vector<32x32xbf16>
    %cst_46 = arith.constant dense<0.000000e+00> : vector<16x32xf32>
    %144 = tpu.matmul %141, %143, %cst_46 {dimension_numbers = #tpu.dot_dimension_numbers<[1], [0], [0], [1], [0, 0, 1, 1], [], []>} : vector<16x32xbf16>, vector<32x32xbf16>, vector<16x32xf32> -> vector<16x32xf32>
    %c1_47 = arith.constant 1 : index
    %c0_48 = arith.constant 0 : index
    %c0_49 = arith.constant 0 : index
    %145 = vector.load %arg4[%c1_47, %c0_48, %c0_49] : memref<3x32x32xbf16, #tpu.memory_space<vmem>>, vector<1x32x32xbf16>
    %146 = vector.shape_cast %145 : vector<1x32x32xbf16> to vector<32x32xbf16>
    %cst_50 = arith.constant dense<0.000000e+00> : vector<16x32xf32>
    %147 = tpu.matmul %136, %146, %cst_50 {dimension_numbers = #tpu.dot_dimension_numbers<[1], [0], [0], [1], [0, 0, 1, 1], [], []>} : vector<16x32xbf16>, vector<32x32xbf16>, vector<16x32xf32> -> vector<16x32xf32>
    %148 = arith.addf %144, %147 : vector<16x32xf32>
    %149 = vector.extract_strided_slice %136 {offsets = [1, 0], sizes = [15, 32], strides = [1, 1]} : vector<16x32xbf16> to vector<15x32xbf16>
    %150 = vector.extract_strided_slice %136 {offsets = [0, 0], sizes = [1, 32], strides = [1, 1]} : vector<16x32xbf16> to vector<1x32xbf16>
    %151 = tpu.concatenate %149, %150 in 0 : vector<15x32xbf16>, vector<1x32xbf16> -> vector<16x32xbf16>
    %152 = vector.broadcast %43 : vector<16x1xbf16> to vector<16x32xbf16>
    %153 = arith.mulf %151, %152 : vector<16x32xbf16>
    %c2_51 = arith.constant 2 : index
    %c0_52 = arith.constant 0 : index
    %c0_53 = arith.constant 0 : index
    %154 = vector.load %arg4[%c2_51, %c0_52, %c0_53] : memref<3x32x32xbf16, #tpu.memory_space<vmem>>, vector<1x32x32xbf16>
    %155 = vector.shape_cast %154 : vector<1x32x32xbf16> to vector<32x32xbf16>
    %cst_54 = arith.constant dense<0.000000e+00> : vector<16x32xf32>
    %156 = tpu.matmul %153, %155, %cst_54 {dimension_numbers = #tpu.dot_dimension_numbers<[1], [0], [0], [1], [0, 0, 1, 1], [], []>} : vector<16x32xbf16>, vector<32x32xbf16>, vector<16x32xf32> -> vector<16x32xf32>
    %157 = arith.addf %148, %156 : vector<16x32xf32>
    %c0_55 = arith.constant 0 : index
    %c0_56 = arith.constant 0 : index
    %158 = vector.load %arg5[%c0_55, %c0_56] : memref<1x32xf32, #tpu.memory_space<vmem>>, vector<1x32xf32>
    %159 = vector.broadcast %158 : vector<1x32xf32> to vector<16x32xf32>
    %160 = arith.addf %157, %159 : vector<16x32xf32>
    %cst_57 = arith.constant 2.000000e-01 : f32
    %161 = vector.broadcast %cst_57 : f32 to vector<16x32xf32>
    %162 = arith.mulf %161, %160 : vector<16x32xf32>
    %163 = arith.maximumf %160, %162 : vector<16x32xf32>
    %164 = arith.truncf %163 : vector<16x32xf32> to vector<16x32xbf16>
    %c0_58 = arith.constant 0 : index
    %c0_59 = arith.constant 0 : index
    %c0_60 = arith.constant 0 : index
    %165 = vector.load %arg6[%c0_58, %c0_59, %c0_60] : memref<2x32x48xbf16, #tpu.memory_space<vmem>>, vector<1x32x48xbf16>
    %166 = vector.shape_cast %165 : vector<1x32x48xbf16> to vector<32x48xbf16>
    %cst_61 = arith.constant dense<0.000000e+00> : vector<16x48xf32>
    %167 = tpu.matmul %164, %166, %cst_61 {dimension_numbers = #tpu.dot_dimension_numbers<[1], [0], [0], [1], [0, 0, 1, 1], [], []>} : vector<16x32xbf16>, vector<32x48xbf16>, vector<16x48xf32> -> vector<16x48xf32>
    %c0_62 = arith.constant 0 : index
    %c0_63 = arith.constant 0 : index
    %168 = vector.load %arg7[%c0_62, %c0_63] : memref<1x48xf32, #tpu.memory_space<vmem>>, vector<1x48xf32>
    %169 = vector.broadcast %168 : vector<1x48xf32> to vector<16x48xf32>
    %170 = arith.addf %167, %169 : vector<16x48xf32>
    %cst_64 = arith.constant 2.000000e-01 : f32
    %171 = vector.broadcast %cst_64 : f32 to vector<16x48xf32>
    %172 = arith.mulf %171, %170 : vector<16x48xf32>
    %173 = arith.maximumf %170, %172 : vector<16x48xf32>
    %c1_65 = arith.constant 1 : index
    %c0_66 = arith.constant 0 : index
    %c0_67 = arith.constant 0 : index
    %174 = vector.load %arg6[%c1_65, %c0_66, %c0_67] : memref<2x32x48xbf16, #tpu.memory_space<vmem>>, vector<1x32x48xbf16>
    %175 = vector.shape_cast %174 : vector<1x32x48xbf16> to vector<32x48xbf16>
    %cst_68 = arith.constant dense<0.000000e+00> : vector<16x48xf32>
    %176 = tpu.matmul %164, %175, %cst_68 {dimension_numbers = #tpu.dot_dimension_numbers<[1], [0], [0], [1], [0, 0, 1, 1], [], []>} : vector<16x32xbf16>, vector<32x48xbf16>, vector<16x48xf32> -> vector<16x48xf32>
    %c0_69 = arith.constant 0 : index
    %c0_70 = arith.constant 0 : index
    %177 = vector.load %arg7[%c0_69, %c0_70] : memref<1x48xf32, #tpu.memory_space<vmem>>, vector<1x48xf32>
    %178 = vector.broadcast %177 : vector<1x48xf32> to vector<16x48xf32>
    %179 = arith.addf %176, %178 : vector<16x48xf32>
    %cst_71 = arith.constant 2.000000e-01 : f32
    %180 = vector.broadcast %cst_71 : f32 to vector<16x48xf32>
    %181 = arith.mulf %180, %179 : vector<16x48xf32>
    %182 = arith.maximumf %179, %181 : vector<16x48xf32>
    %c0_72 = arith.constant 0 : index
    %c0_73 = arith.constant 0 : index
    %183 = tpu.strided_load %arg14[%c0_72, %c0_73] {strides = array<i32: 2, 1>} : memref<32x48xf32, #tpu.memory_space<vmem>>, vector<16x48xf32>
    tpu.strided_store %arg14[%c0_72, %c0_73], %173 {strides = array<i32: 2, 1>} : memref<32x48xf32, #tpu.memory_space<vmem>>, vector<16x48xf32>
    %c1_74 = arith.constant 1 : index
    %c0_75 = arith.constant 0 : index
    %184 = tpu.strided_load %arg14[%c1_74, %c0_75] {strides = array<i32: 2, 1>} : memref<32x48xf32, #tpu.memory_space<vmem>>, vector<16x48xf32>
    tpu.strided_store %arg14[%c1_74, %c0_75], %182 {strides = array<i32: 2, 1>} : memref<32x48xf32, #tpu.memory_space<vmem>>, vector<16x48xf32>
    %c0_76 = arith.constant 0 : index
    %c0_77 = arith.constant 0 : index
    %185 = vector.load %arg14[%c0_76, %c0_77] : memref<32x48xf32, #tpu.memory_space<vmem>>, vector<32x48xf32>
    %186 = arith.truncf %185 : vector<32x48xf32> to vector<32x48xbf16>
    %187 = vector.extract_strided_slice %186 {offsets = [31, 0], sizes = [1, 48], strides = [1, 1]} : vector<32x48xbf16> to vector<1x48xbf16>
    %188 = vector.extract_strided_slice %186 {offsets = [0, 0], sizes = [31, 48], strides = [1, 1]} : vector<32x48xbf16> to vector<31x48xbf16>
    %189 = tpu.concatenate %187, %188 in 0 : vector<1x48xbf16>, vector<31x48xbf16> -> vector<32x48xbf16>
    %190 = vector.broadcast %65 : vector<32x1xbf16> to vector<32x48xbf16>
    %191 = arith.mulf %189, %190 : vector<32x48xbf16>
    %c0_78 = arith.constant 0 : index
    %c0_79 = arith.constant 0 : index
    %c0_80 = arith.constant 0 : index
    %192 = vector.load %arg8[%c0_78, %c0_79, %c0_80] : memref<3x48x64xbf16, #tpu.memory_space<vmem>>, vector<1x48x64xbf16>
    %193 = vector.shape_cast %192 : vector<1x48x64xbf16> to vector<48x64xbf16>
    %cst_81 = arith.constant dense<0.000000e+00> : vector<32x64xf32>
    %194 = tpu.matmul %191, %193, %cst_81 {dimension_numbers = #tpu.dot_dimension_numbers<[1], [0], [0], [1], [0, 0, 1, 1], [], []>} : vector<32x48xbf16>, vector<48x64xbf16>, vector<32x64xf32> -> vector<32x64xf32>
    %c1_82 = arith.constant 1 : index
    %c0_83 = arith.constant 0 : index
    %c0_84 = arith.constant 0 : index
    %195 = vector.load %arg8[%c1_82, %c0_83, %c0_84] : memref<3x48x64xbf16, #tpu.memory_space<vmem>>, vector<1x48x64xbf16>
    %196 = vector.shape_cast %195 : vector<1x48x64xbf16> to vector<48x64xbf16>
    %cst_85 = arith.constant dense<0.000000e+00> : vector<32x64xf32>
    %197 = tpu.matmul %186, %196, %cst_85 {dimension_numbers = #tpu.dot_dimension_numbers<[1], [0], [0], [1], [0, 0, 1, 1], [], []>} : vector<32x48xbf16>, vector<48x64xbf16>, vector<32x64xf32> -> vector<32x64xf32>
    %198 = arith.addf %194, %197 : vector<32x64xf32>
    %199 = vector.extract_strided_slice %186 {offsets = [1, 0], sizes = [31, 48], strides = [1, 1]} : vector<32x48xbf16> to vector<31x48xbf16>
    %200 = vector.extract_strided_slice %186 {offsets = [0, 0], sizes = [1, 48], strides = [1, 1]} : vector<32x48xbf16> to vector<1x48xbf16>
    %201 = tpu.concatenate %199, %200 in 0 : vector<31x48xbf16>, vector<1x48xbf16> -> vector<32x48xbf16>
    %202 = vector.broadcast %87 : vector<32x1xbf16> to vector<32x48xbf16>
    %203 = arith.mulf %201, %202 : vector<32x48xbf16>
    %c2_86 = arith.constant 2 : index
    %c0_87 = arith.constant 0 : index
    %c0_88 = arith.constant 0 : index
    %204 = vector.load %arg8[%c2_86, %c0_87, %c0_88] : memref<3x48x64xbf16, #tpu.memory_space<vmem>>, vector<1x48x64xbf16>
    %205 = vector.shape_cast %204 : vector<1x48x64xbf16> to vector<48x64xbf16>
    %cst_89 = arith.constant dense<0.000000e+00> : vector<32x64xf32>
    %206 = tpu.matmul %203, %205, %cst_89 {dimension_numbers = #tpu.dot_dimension_numbers<[1], [0], [0], [1], [0, 0, 1, 1], [], []>} : vector<32x48xbf16>, vector<48x64xbf16>, vector<32x64xf32> -> vector<32x64xf32>
    %207 = arith.addf %198, %206 : vector<32x64xf32>
    %c0_90 = arith.constant 0 : index
    %c0_91 = arith.constant 0 : index
    %208 = vector.load %arg9[%c0_90, %c0_91] : memref<1x64xf32, #tpu.memory_space<vmem>>, vector<1x64xf32>
    %209 = vector.broadcast %208 : vector<1x64xf32> to vector<32x64xf32>
    %210 = arith.addf %207, %209 : vector<32x64xf32>
    %cst_92 = arith.constant 2.000000e-01 : f32
    %211 = vector.broadcast %cst_92 : f32 to vector<32x64xf32>
    %212 = arith.mulf %211, %210 : vector<32x64xf32>
    %213 = arith.maximumf %210, %212 : vector<32x64xf32>
    %c0_93 = arith.constant 0 : index
    %c0_94 = arith.constant 0 : index
    %214 = vector.load %arg15[%c0_93, %c0_94] : memref<32x64xf32, #tpu.memory_space<vmem>>, vector<32x64xf32>
    tpu.vector_store %arg15[%c0_93, %c0_94], %213 {strides = array<i32>} : memref<32x64xf32, #tpu.memory_space<vmem>>, vector<32x64xf32>,
    %c0_95 = arith.constant 0 : index
    %c0_96 = arith.constant 0 : index
    %215 = tpu.strided_load %arg15[%c0_95, %c0_96] {strides = array<i32: 2, 1>} : memref<32x64xf32, #tpu.memory_space<vmem>>, vector<16x64xf32>
    %216 = arith.truncf %215 : vector<16x64xf32> to vector<16x64xbf16>
    %c1_97 = arith.constant 1 : index
    %c0_98 = arith.constant 0 : index
    %217 = tpu.strided_load %arg15[%c1_97, %c0_98] {strides = array<i32: 2, 1>} : memref<32x64xf32, #tpu.memory_space<vmem>>, vector<16x64xf32>
    %218 = arith.truncf %217 : vector<16x64xf32> to vector<16x64xbf16>
    %219 = vector.extract_strided_slice %218 {offsets = [15, 0], sizes = [1, 64], strides = [1, 1]} : vector<16x64xbf16> to vector<1x64xbf16>
    %220 = vector.extract_strided_slice %218 {offsets = [0, 0], sizes = [15, 64], strides = [1, 1]} : vector<16x64xbf16> to vector<15x64xbf16>
    %221 = tpu.concatenate %219, %220 in 0 : vector<1x64xbf16>, vector<15x64xbf16> -> vector<16x64xbf16>
    %222 = vector.broadcast %21 : vector<16x1xbf16> to vector<16x64xbf16>
    %223 = arith.mulf %221, %222 : vector<16x64xbf16>
    %c0_99 = arith.constant 0 : index
    %c0_100 = arith.constant 0 : index
    %c0_101 = arith.constant 0 : index
    %224 = vector.load %arg10[%c0_99, %c0_100, %c0_101] : memref<3x64x64xbf16, #tpu.memory_space<vmem>>, vector<1x64x64xbf16>
    %225 = vector.shape_cast %224 : vector<1x64x64xbf16> to vector<64x64xbf16>
    %cst_102 = arith.constant dense<0.000000e+00> : vector<16x64xf32>
    %226 = tpu.matmul %223, %225, %cst_102 {dimension_numbers = #tpu.dot_dimension_numbers<[1], [0], [0], [1], [0, 0, 1, 1], [], []>} : vector<16x64xbf16>, vector<64x64xbf16>, vector<16x64xf32> -> vector<16x64xf32>
    %c1_103 = arith.constant 1 : index
    %c0_104 = arith.constant 0 : index
    %c0_105 = arith.constant 0 : index
    %227 = vector.load %arg10[%c1_103, %c0_104, %c0_105] : memref<3x64x64xbf16, #tpu.memory_space<vmem>>, vector<1x64x64xbf16>
    %228 = vector.shape_cast %227 : vector<1x64x64xbf16> to vector<64x64xbf16>
    %cst_106 = arith.constant dense<0.000000e+00> : vector<16x64xf32>
    %229 = tpu.matmul %216, %228, %cst_106 {dimension_numbers = #tpu.dot_dimension_numbers<[1], [0], [0], [1], [0, 0, 1, 1], [], []>} : vector<16x64xbf16>, vector<64x64xbf16>, vector<16x64xf32> -> vector<16x64xf32>
    %230 = arith.addf %226, %229 : vector<16x64xf32>
    %c2_107 = arith.constant 2 : index
    %c0_108 = arith.constant 0 : index
    %c0_109 = arith.constant 0 : index
    %231 = vector.load %arg10[%c2_107, %c0_108, %c0_109] : memref<3x64x64xbf16, #tpu.memory_space<vmem>>, vector<1x64x64xbf16>
    %232 = vector.shape_cast %231 : vector<1x64x64xbf16> to vector<64x64xbf16>
    %cst_110 = arith.constant dense<0.000000e+00> : vector<16x64xf32>
    %233 = tpu.matmul %218, %232, %cst_110 {dimension_numbers = #tpu.dot_dimension_numbers<[1], [0], [0], [1], [0, 0, 1, 1], [], []>} : vector<16x64xbf16>, vector<64x64xbf16>, vector<16x64xf32> -> vector<16x64xf32>
    %234 = arith.addf %230, %233 : vector<16x64xf32>
    %c0_111 = arith.constant 0 : index
    %c0_112 = arith.constant 0 : index
    %235 = vector.load %arg11[%c0_111, %c0_112] : memref<1x64xf32, #tpu.memory_space<vmem>>, vector<1x64xf32>
    %236 = vector.broadcast %235 : vector<1x64xf32> to vector<16x64xf32>
    %237 = arith.addf %234, %236 : vector<16x64xf32>
    %cst_113 = arith.constant 2.000000e-01 : f32
    %238 = vector.broadcast %cst_113 : f32 to vector<16x64xf32>
    %239 = arith.mulf %238, %237 : vector<16x64xf32>
    %240 = arith.maximumf %237, %239 : vector<16x64xf32>
    %c0_114 = arith.constant 0 : index
    %c0_115 = arith.constant 0 : index
    %241 = vector.load %arg16[%c0_114, %c0_115] : memref<16x64xf32, #tpu.memory_space<vmem>>, vector<16x64xf32>
    tpu.vector_store %arg16[%c0_114, %c0_115], %240 {strides = array<i32>} : memref<16x64xf32, #tpu.memory_space<vmem>>, vector<16x64xf32>,
    %c0_116 = arith.constant 0 : index
    %c0_117 = arith.constant 0 : index
    %242 = tpu.strided_load %arg16[%c0_116, %c0_117] {strides = array<i32: 2, 1>} : memref<16x64xf32, #tpu.memory_space<vmem>>, vector<8x64xf32>
    %243 = arith.truncf %242 : vector<8x64xf32> to vector<8x64xbf16>
    %c1_118 = arith.constant 1 : index
    %c0_119 = arith.constant 0 : index
    %244 = tpu.strided_load %arg16[%c1_118, %c0_119] {strides = array<i32: 2, 1>} : memref<16x64xf32, #tpu.memory_space<vmem>>, vector<8x64xf32>
    %245 = arith.truncf %244 : vector<8x64xf32> to vector<8x64xbf16>
    %246 = vector.extract_strided_slice %245 {offsets = [7, 0], sizes = [1, 64], strides = [1, 1]} : vector<8x64xbf16> to vector<1x64xbf16>
    %247 = vector.extract_strided_slice %245 {offsets = [0, 0], sizes = [7, 64], strides = [1, 1]} : vector<8x64xbf16> to vector<7x64xbf16>
    %248 = tpu.concatenate %246, %247 in 0 : vector<1x64xbf16>, vector<7x64xbf16> -> vector<8x64xbf16>
    %249 = vector.broadcast %109 : vector<8x1xbf16> to vector<8x64xbf16>
    %250 = arith.mulf %248, %249 : vector<8x64xbf16>
    %c0_120 = arith.constant 0 : index
    %c0_121 = arith.constant 0 : index
    %c0_122 = arith.constant 0 : index
    %251 = vector.load %arg12[%c0_120, %c0_121, %c0_122] : memref<3x64x64xbf16, #tpu.memory_space<vmem>>, vector<1x64x64xbf16>
    %252 = vector.shape_cast %251 : vector<1x64x64xbf16> to vector<64x64xbf16>
    %cst_123 = arith.constant dense<0.000000e+00> : vector<8x64xf32>
    %253 = tpu.matmul %250, %252, %cst_123 {dimension_numbers = #tpu.dot_dimension_numbers<[1], [0], [0], [1], [0, 0, 1, 1], [], []>} : vector<8x64xbf16>, vector<64x64xbf16>, vector<8x64xf32> -> vector<8x64xf32>
    %c1_124 = arith.constant 1 : index
    %c0_125 = arith.constant 0 : index
    %c0_126 = arith.constant 0 : index
    %254 = vector.load %arg12[%c1_124, %c0_125, %c0_126] : memref<3x64x64xbf16, #tpu.memory_space<vmem>>, vector<1x64x64xbf16>
    %255 = vector.shape_cast %254 : vector<1x64x64xbf16> to vector<64x64xbf16>
    %cst_127 = arith.constant dense<0.000000e+00> : vector<8x64xf32>
    %256 = tpu.matmul %243, %255, %cst_127 {dimension_numbers = #tpu.dot_dimension_numbers<[1], [0], [0], [1], [0, 0, 1, 1], [], []>} : vector<8x64xbf16>, vector<64x64xbf16>, vector<8x64xf32> -> vector<8x64xf32>
    %257 = arith.addf %253, %256 : vector<8x64xf32>
    %c2_128 = arith.constant 2 : index
    %c0_129 = arith.constant 0 : index
    %c0_130 = arith.constant 0 : index
    %258 = vector.load %arg12[%c2_128, %c0_129, %c0_130] : memref<3x64x64xbf16, #tpu.memory_space<vmem>>, vector<1x64x64xbf16>
    %259 = vector.shape_cast %258 : vector<1x64x64xbf16> to vector<64x64xbf16>
    %cst_131 = arith.constant dense<0.000000e+00> : vector<8x64xf32>
    %260 = tpu.matmul %245, %259, %cst_131 {dimension_numbers = #tpu.dot_dimension_numbers<[1], [0], [0], [1], [0, 0, 1, 1], [], []>} : vector<8x64xbf16>, vector<64x64xbf16>, vector<8x64xf32> -> vector<8x64xf32>
    %261 = arith.addf %257, %260 : vector<8x64xf32>
    %c0_132 = arith.constant 0 : index
    %c0_133 = arith.constant 0 : index
    %262 = vector.load %arg13[%c0_132, %c0_133] : memref<1x64xf32, #tpu.memory_space<vmem>>, vector<1x64xf32>
    %263 = vector.broadcast %262 : vector<1x64xf32> to vector<8x64xf32>
    %264 = arith.addf %261, %263 : vector<8x64xf32>
    %cst_134 = arith.constant 2.000000e-01 : f32
    %265 = vector.broadcast %cst_134 : f32 to vector<8x64xf32>
    %266 = arith.mulf %265, %264 : vector<8x64xf32>
    %267 = arith.maximumf %264, %266 : vector<8x64xf32>
    %c0_135 = arith.constant 0 : index
    %c0_136 = arith.constant 0 : index
    %268 = vector.load %arg17[%c0_135, %c0_136] : memref<8x64xf32, #tpu.memory_space<vmem>>, vector<8x64xf32>
    tpu.vector_store %arg17[%c0_135, %c0_136], %267 {strides = array<i32>} : memref<8x64xf32, #tpu.memory_space<vmem>>, vector<8x64xf32>,
    return
  }
  func.func @transform_0(%arg0: i32) -> (i32, i32) {
    %c0_i32 = arith.constant 0 : i32
    %c0_i32_0 = arith.constant 0 : i32
    return %arg0, %c0_i32 : i32, i32
  }
  func.func @transform_1(%arg0: i32) -> (i32, i32, i32) {
    %c0_i32 = arith.constant 0 : i32
    %c0_i32_0 = arith.constant 0 : i32
    %c0_i32_1 = arith.constant 0 : i32
    %c0_i32_2 = arith.constant 0 : i32
    return %c0_i32, %c0_i32_0, %c0_i32_1 : i32, i32, i32
  }
  func.func @transform_2(%arg0: i32) -> (i32, i32) {
    %c0_i32 = arith.constant 0 : i32
    %c0_i32_0 = arith.constant 0 : i32
    %c0_i32_1 = arith.constant 0 : i32
    return %c0_i32, %c0_i32_0 : i32, i32
  }
  func.func @transform_3(%arg0: i32) -> (i32, i32, i32) {
    %c0_i32 = arith.constant 0 : i32
    %c0_i32_0 = arith.constant 0 : i32
    %c0_i32_1 = arith.constant 0 : i32
    %c0_i32_2 = arith.constant 0 : i32
    return %c0_i32, %c0_i32_0, %c0_i32_1 : i32, i32, i32
  }
  func.func @transform_4(%arg0: i32) -> (i32, i32) {
    %c0_i32 = arith.constant 0 : i32
    %c0_i32_0 = arith.constant 0 : i32
    %c0_i32_1 = arith.constant 0 : i32
    return %c0_i32, %c0_i32_0 : i32, i32
  }
  func.func @transform_5(%arg0: i32) -> (i32, i32, i32) {
    %c0_i32 = arith.constant 0 : i32
    %c0_i32_0 = arith.constant 0 : i32
    %c0_i32_1 = arith.constant 0 : i32
    %c0_i32_2 = arith.constant 0 : i32
    return %c0_i32, %c0_i32_0, %c0_i32_1 : i32, i32, i32
  }
  func.func @transform_6(%arg0: i32) -> (i32, i32) {
    %c0_i32 = arith.constant 0 : i32
    %c0_i32_0 = arith.constant 0 : i32
    %c0_i32_1 = arith.constant 0 : i32
    return %c0_i32, %c0_i32_0 : i32, i32
  }
  func.func @transform_7(%arg0: i32) -> (i32, i32, i32) {
    %c0_i32 = arith.constant 0 : i32
    %c0_i32_0 = arith.constant 0 : i32
    %c0_i32_1 = arith.constant 0 : i32
    %c0_i32_2 = arith.constant 0 : i32
    return %c0_i32, %c0_i32_0, %c0_i32_1 : i32, i32, i32
  }
  func.func @transform_8(%arg0: i32) -> (i32, i32) {
    %c0_i32 = arith.constant 0 : i32
    %c0_i32_0 = arith.constant 0 : i32
    %c0_i32_1 = arith.constant 0 : i32
    return %c0_i32, %c0_i32_0 : i32, i32
  }
  func.func @transform_9(%arg0: i32) -> (i32, i32, i32) {
    %c0_i32 = arith.constant 0 : i32
    %c0_i32_0 = arith.constant 0 : i32
    %c0_i32_1 = arith.constant 0 : i32
    %c0_i32_2 = arith.constant 0 : i32
    return %c0_i32, %c0_i32_0, %c0_i32_1 : i32, i32, i32
  }
  func.func @transform_10(%arg0: i32) -> (i32, i32) {
    %c0_i32 = arith.constant 0 : i32
    %c0_i32_0 = arith.constant 0 : i32
    %c0_i32_1 = arith.constant 0 : i32
    return %c0_i32, %c0_i32_0 : i32, i32
  }
  func.func @transform_11(%arg0: i32) -> (i32, i32, i32) {
    %c0_i32 = arith.constant 0 : i32
    %c0_i32_0 = arith.constant 0 : i32
    %c0_i32_1 = arith.constant 0 : i32
    %c0_i32_2 = arith.constant 0 : i32
    return %c0_i32, %c0_i32_0, %c0_i32_1 : i32, i32, i32
  }
  func.func @transform_12(%arg0: i32) -> (i32, i32) {
    %c0_i32 = arith.constant 0 : i32
    %c0_i32_0 = arith.constant 0 : i32
    %c0_i32_1 = arith.constant 0 : i32
    return %c0_i32, %c0_i32_0 : i32, i32
  }
  func.func @transform_13(%arg0: i32) -> (i32, i32) {
    %c0_i32 = arith.constant 0 : i32
    %c0_i32_0 = arith.constant 0 : i32
    return %arg0, %c0_i32 : i32, i32
  }
  func.func @transform_14(%arg0: i32) -> (i32, i32) {
    %c0_i32 = arith.constant 0 : i32
    %c0_i32_0 = arith.constant 0 : i32
    return %arg0, %c0_i32 : i32, i32
  }
  func.func @transform_15(%arg0: i32) -> (i32, i32) {
    %c0_i32 = arith.constant 0 : i32
    %c0_i32_0 = arith.constant 0 : i32
    return %arg0, %c0_i32 : i32, i32
  }
  func.func @transform_16(%arg0: i32) -> (i32, i32) {
    %c0_i32 = arith.constant 0 : i32
    %c0_i32_0 = arith.constant 0 : i32
    return %arg0, %c0_i32 : i32, i32
  }
}

</mosaic_0001>

<llo_original>
// kernel: tile.33
$region0: #{tile.33}
  #allocation0 [shape = 's32[1]{0}', space=sflag, size = 0x4, scoped, tag = 'scoped memory for tile.33']
  %s0 = inlined_call_operand.vmem [shape: f32[4], index: 0, kind: input, shape index: {}]
  %s1 = inlined_call_operand.vmem [shape: f32[8,4], index: 1, kind: output, shape index: {}]
  // Predicated region
  $region2: #{tile.33} parent=0 // pred_check
    _
  $region3: #{tile.33} parent=0 // pred_check_branch
    %3 = sbr.rel (0) target = $region5
  $region4: #{tile.33} parent=0 // pred_region
    _
  $region5: #{tile.33} parent=0 // pred_fallthru
    _
  %v4 = vld [vmem:[%s0] ss:$0 sm:$0xff]
  %5 = vst [vmem:[%s1] sm:$0xff] %v4

// kernel: tile.34
$region0: #{tile.34}
  %s0 = inlined_call_operand.vmem [shape: f32[8,4], index: 0, kind: input, shape index: {}]
  %s1 = inlined_call_operand.vmem [shape: f32[1,32], index: 1, kind: output, shape index: {}]
  $region1: #{tile.34} parent=0
    #allocation0 [shape = 'u8[4096]{0}', space=vmem, size = 0x1000, scoped, tag = 'scoped mem for output reshape']
    %v2 = vld [vmem:[%s0] sm:$0x1]
    %vm3 = vcmask 31744
    %4 = vst.msk [vmem:[#allocation0] sm:$0x1] %vm3, %v2
    %s5 = scalar_lea.vmem %s0, 7
    %v6 = vld [vmem:[%s5] sm:$0x1]
    %7 = vrot.lane.b32.xlu0 %v6, 28
    %v8 = vpop.permute.xlu0 %7
    %vm9 = vcmask 261344
    %10 = vst.msk [vmem:[#allocation0] sm:$0x1] %vm9, %v8
    %s11 = scalar_lea.vmem %s0, 6
    %v12 = vld [vmem:[%s11] sm:$0x1]
    %13 = vrot.lane.b32.xlu0 %v12, 24
    %v14 = vpop.permute.xlu0 %13
    %vm15 = vcmask 228544
    %16 = vst.msk [vmem:[#allocation0] sm:$0x1] %vm15, %v14
    %s17 = scalar_lea.vmem %s0, 5
    %v18 = vld [vmem:[%s17] sm:$0x1]
    %19 = vrot.lane.b32.xlu0 %v18, 20
    %v20 = vpop.permute.xlu0 %19
    %vm21 = vcmask 195744
    %22 = vst.msk [vmem:[#allocation0] sm:$0x1] %vm21, %v20
    %s23 = scalar_lea.vmem %s0, 4
    %v24 = vld [vmem:[%s23] sm:$0x1]
    %25 = vrot.lane.b32.xlu0 %v24, 16
    %v26 = vpop.permute.xlu0 %25
    %vm27 = vcmask 162944
    %28 = vst.msk [vmem:[#allocation0] sm:$0x1] %vm27, %v26
    %s29 = scalar_lea.vmem %s0, 3
    %v30 = vld [vmem:[%s29] sm:$0x1]
    %31 = vrot.lane.b32.xlu0 %v30, 12
    %v32 = vpop.permute.xlu0 %31
    %vm33 = vcmask 130144
    %34 = vst.msk [vmem:[#allocation0] sm:$0x1] %vm33, %v32
    %s35 = scalar_lea.vmem %s0, 2
    %v36 = vld [vmem:[%s35] sm:$0x1]
    %37 = vrot.lane.b32.xlu0 %v36, 8
    %v38 = vpop.permute.xlu0 %37
    %vm39 = vcmask 97344
    %40 = vst.msk [vmem:[#allocation0] sm:$0x1] %vm39, %v38
    %s41 = scalar_lea.vmem %s0, 1
    %v42 = vld [vmem:[%s41] sm:$0x1]
    %43 = vrot.lane.b32.xlu0 %v42, 4
    %v44 = vpop.permute.xlu0 %43
    %vm45 = vcmask 64544
    %46 = vst.msk [vmem:[#allocation0] sm:$0x1] %vm45, %v44
    %s48 = sshllo.u32 0, 1
    %v50 = vld [vmem:[#allocation0] sm:%s48]
    %s51 = sshllo.u32 0, 1
    %52 = vst [vmem:[%s1] sm:%s51] %v50

// kernel: tile.43
$region0: #{tile.43}
  #allocation0 [shape = 's32[1]{0}', space=sflag, size = 0x4, scoped, tag = 'scoped memory for tile.43']
  %s0 = inlined_call_operand.vmem [shape: f32[3], index: 0, kind: input, shape index: {}]
  %s1 = inlined_call_operand.vmem [shape: f32[16,3], index: 1, kind: output, shape index: {}]
  // Predicated region
  $region2: #{tile.43} parent=0 // pred_check
    _
  $region3: #{tile.43} parent=0 // pred_check_branch
    %3 = sbr.rel (0) target = $region5
  $region4: #{tile.43} parent=0 // pred_region
    _
  $region5: #{tile.43} parent=0 // pred_fallthru
    _
  %v4 = vld [vmem:[%s0] ss:$0 sm:$0xff]
  %5 = vst [vmem:[%s1] sm:$0xff] %v4
  %s6 = scalar_lea.vmem %s1, 8
  %7 = vst [vmem:[%s6] sm:$0xff] %v4

// kernel: tile.44
$region0: #{tile.44}
  %s0 = inlined_call_operand.vmem [shape: f32[16,3], index: 0, kind: input, shape index: {}]
  %s1 = inlined_call_operand.vmem [shape: f32[1,48], index: 1, kind: output, shape index: {}]
  $region1: #{tile.44} parent=0
    #allocation0 [shape = 'u8[4096]{0}', space=vmem, size = 0x1000, scoped, tag = 'scoped mem for output reshape']
    %v2 = vld [vmem:[%s0] sm:$0x1]
    %vm3 = vcmask 23552
    %4 = vst.msk [vmem:[#allocation0] sm:$0x1] %vm3, %v2
    %s5 = scalar_lea.vmem %s0, 15
    %v6 = vld [vmem:[%s5] sm:$0x1]
    %7 = vrot.lane.b32.xlu0 %v6, 45
    %v8 = vpop.permute.xlu0 %7
    %vm9 = vcmask 392552
    %10 = vst.msk [vmem:[#allocation0] sm:$0x1] %vm9, %v8
    %s11 = scalar_lea.vmem %s0, 14
    %v12 = vld [vmem:[%s11] sm:$0x1]
    %13 = vrot.lane.b32.xlu0 %v12, 42
    %v14 = vpop.permute.xlu0 %13
    %vm15 = vcmask 367952
    %16 = vst.msk [vmem:[#allocation0] sm:$0x1] %vm15, %v14
    %s17 = scalar_lea.vmem %s0, 13
    %v18 = vld [vmem:[%s17] sm:$0x1]
    %19 = vrot.lane.b32.xlu0 %v18, 39
    %v20 = vpop.permute.xlu0 %19
    %vm21 = vcmask 343352
    %22 = vst.msk [vmem:[#allocation0] sm:$0x1] %vm21, %v20
    %s23 = scalar_lea.vmem %s0, 12
    %v24 = vld [vmem:[%s23] sm:$0x1]
    %25 = vrot.lane.b32.xlu0 %v24, 36
    %v26 = vpop.permute.xlu0 %25
    %vm27 = vcmask 318752
    %28 = vst.msk [vmem:[#allocation0] sm:$0x1] %vm27, %v26
    %s29 = scalar_lea.vmem %s0, 11
    %v30 = vld [vmem:[%s29] sm:$0x1]
    %31 = vrot.lane.b32.xlu0 %v30, 33
    %v32 = vpop.permute.xlu0 %31
    %vm33 = vcmask 294152
    %34 = vst.msk [vmem:[#allocation0] sm:$0x1] %vm33, %v32
    %s35 = scalar_lea.vmem %s0, 10
    %v36 = vld [vmem:[%s35] sm:$0x1]
    %37 = vrot.lane.b32.xlu0 %v36, 30
    %v38 = vpop.permute.xlu0 %37
    %vm39 = vcmask 269552
    %40 = vst.msk [vmem:[#allocation0] sm:$0x1] %vm39, %v38
    %s41 = scalar_lea.vmem %s0, 9
    %v42 = vld [vmem:[%s41] sm:$0x1]
    %43 = vrot.lane.b32.xlu0 %v42, 27
    %v44 = vpop.permute.xlu0 %43
    %vm45 = vcmask 244952
    %46 = vst.msk [vmem:[#allocation0] sm:$0x1] %vm45, %v44
    %s47 = scalar_lea.vmem %s0, 8
    %v48 = vld [vmem:[%s47] sm:$0x1]
    %49 = vrot.lane.b32.xlu0 %v48, 24
    %v50 = vpop.permute.xlu0 %49
    %vm51 = vcmask 220352
    %52 = vst.msk [vmem:[#allocation0] sm:$0x1] %vm51, %v50
    %s53 = scalar_lea.vmem %s0, 7
    %v54 = vld [vmem:[%s53] sm:$0x1]
    %55 = vrot.lane.b32.xlu0 %v54, 21
    %v56 = vpop.permute.xlu0 %55
    %vm57 = vcmask 195752
    %58 = vst.msk [vmem:[#allocation0] sm:$0x1] %vm57, %v56
    %s59 = scalar_lea.vmem %s0, 6
    %v60 = vld [vmem:[%s59] sm:$0x1]
    %61 = vrot.lane.b32.xlu0 %v60, 18
    %v62 = vpop.permute.xlu0 %61
    %vm63 = vcmask 171152
    %64 = vst.msk [vmem:[#allocation0] sm:$0x1] %vm63, %v62
    %s65 = scalar_lea.vmem %s0, 5
    %v66 = vld [vmem:[%s65] sm:$0x1]
    %67 = vrot.lane.b32.xlu0 %v66, 15
    %v68 = vpop.permute.xlu0 %67
    %vm69 = vcmask 146552
    %70 = vst.msk [vmem:[#allocation0] sm:$0x1] %vm69, %v68
    %s71 = scalar_lea.vmem %s0, 4
    %v72 = vld [vmem:[%s71] sm:$0x1]
    %73 = vrot.lane.b32.xlu0 %v72, 12
    %v74 = vpop.permute.xlu0 %73
    %vm75 = vcmask 121952
    %76 = vst.msk [vmem:[#allocation0] sm:$0x1] %vm75, %v74
    %s77 = scalar_lea.vmem %s0, 3
    %v78 = vld [vmem:[%s77] sm:$0x1]
    %79 = vrot.lane.b32.xlu0 %v78, 9
    %v80 = vpop.permute.xlu0 %79
    %vm81 = vcmask 97352
    %82 = vst.msk [vmem:[#allocation0] sm:$0x1] %vm81, %v80
    %s83 = scalar_lea.vmem %s0, 2
    %v84 = vld [vmem:[%s83] sm:$0x1]
    %85 = vrot.lane.b32.xlu0 %v84, 6
    %v86 = vpop.permute.xlu0 %85
    %vm87 = vcmask 72752
    %88 = vst.msk [vmem:[#allocation0] sm:$0x1] %vm87, %v86
    %s89 = scalar_lea.vmem %s0, 1
    %v90 = vld [vmem:[%s89] sm:$0x1]
    %91 = vrot.lane.b32.xlu0 %v90, 3
    %v92 = vpop.permute.xlu0 %91
    %vm93 = vcmask 48152
    %94 = vst.msk [vmem:[#allocation0] sm:$0x1] %vm93, %v92
    %s96 = sshllo.u32 0, 1
    %v98 = vld [vmem:[#allocation0] sm:%s96]
    %s99 = sshllo.u32 0, 1
    %100 = vst [vmem:[%s1] sm:%s99] %v98

// kernel: tile.48
$region0: #{tile.48}
  #allocation0 [shape = 's32[1]{0}', space=sflag, size = 0x4, scoped, tag = 'scoped memory for tile.48']
  %s0 = inlined_call_operand.vmem [shape: f32[4], index: 0, kind: input, shape index: {}]
  %s1 = inlined_call_operand.vmem [shape: f32[16,4], index: 1, kind: output, shape index: {}]
  // Predicated region
  $region2: #{tile.48} parent=0 // pred_check
    _
  $region3: #{tile.48} parent=0 // pred_check_branch
    %3 = sbr.rel (0) target = $region5
  $region4: #{tile.48} parent=0 // pred_region
    _
  $region5: #{tile.48} parent=0 // pred_fallthru
    _
  %v4 = vld [vmem:[%s0] ss:$0 sm:$0xff]
  %5 = vst [vmem:[%s1] sm:$0xff] %v4
  %s6 = scalar_lea.vmem %s1, 8
  %7 = vst [vmem:[%s6] sm:$0xff] %v4

// kernel: tile.49
$region0: #{tile.49}
  %s0 = inlined_call_operand.vmem [shape: f32[16,4], index: 0, kind: input, shape index: {}]
  %s1 = inlined_call_operand.vmem [shape: f32[1,64], index: 1, kind: output, shape index: {}]
  $region1: #{tile.49} parent=0
    #allocation0 [shape = 'u8[4096]{0}', space=vmem, size = 0x1000, scoped, tag = 'scoped mem for output reshape']
    %v2 = vld [vmem:[%s0] sm:$0x1]
    %vm3 = vcmask 31744
    %4 = vst.msk [vmem:[#allocation0] sm:$0x1] %vm3, %v2
    %s5 = scalar_lea.vmem %s0, 15
    %v6 = vld [vmem:[%s5] sm:$0x1]
    %7 = vrot.lane.b32.xlu0 %v6, 60
    %v8 = vpop.permute.xlu0 %7
    %vm9 = vcmask 523744
    %10 = vst.msk [vmem:[#allocation0] sm:$0x1] %vm9, %v8
    %s11 = scalar_lea.vmem %s0, 14
    %v12 = vld [vmem:[%s11] sm:$0x1]
    %13 = vrot.lane.b32.xlu0 %v12, 56
    %v14 = vpop.permute.xlu0 %13
    %vm15 = vcmask 490944
    %16 = vst.msk [vmem:[#allocation0] sm:$0x1] %vm15, %v14
    %s17 = scalar_lea.vmem %s0, 13
    %v18 = vld [vmem:[%s17] sm:$0x1]
    %19 = vrot.lane.b32.xlu0 %v18, 52
    %v20 = vpop.permute.xlu0 %19
    %vm21 = vcmask 458144
    %22 = vst.msk [vmem:[#allocation0] sm:$0x1] %vm21, %v20
    %s23 = scalar_lea.vmem %s0, 12
    %v24 = vld [vmem:[%s23] sm:$0x1]
    %25 = vrot.lane.b32.xlu0 %v24, 48
    %v26 = vpop.permute.xlu0 %25
    %vm27 = vcmask 425344
    %28 = vst.msk [vmem:[#allocation0] sm:$0x1] %vm27, %v26
    %s29 = scalar_lea.vmem %s0, 11
    %v30 = vld [vmem:[%s29] sm:$0x1]
    %31 = vrot.lane.b32.xlu0 %v30, 44
    %v32 = vpop.permute.xlu0 %31
    %vm33 = vcmask 392544
    %34 = vst.msk [vmem:[#allocation0] sm:$0x1] %vm33, %v32
    %s35 = scalar_lea.vmem %s0, 10
    %v36 = vld [vmem:[%s35] sm:$0x1]
    %37 = vrot.lane.b32.xlu0 %v36, 40
    %v38 = vpop.permute.xlu0 %37
    %vm39 = vcmask 359744
    %40 = vst.msk [vmem:[#allocation0] sm:$0x1] %vm39, %v38
    %s41 = scalar_lea.vmem %s0, 9
    %v42 = vld [vmem:[%s41] sm:$0x1]
    %43 = vrot.lane.b32.xlu0 %v42, 36
    %v44 = vpop.permute.xlu0 %43
    %vm45 = vcmask 326944
    %46 = vst.msk [vmem:[#allocation0] sm:$0x1] %vm45, %v44
    %s47 = scalar_lea.vmem %s0, 8
    %v48 = vld [vmem:[%s47] sm:$0x1]
    %49 = vrot.lane.b32.xlu0 %v48, 32
    %v50 = vpop.permute.xlu0 %49
    %vm51 = vcmask 294144
    %52 = vst.msk [vmem:[#allocation0] sm:$0x1] %vm51, %v50
    %s53 = scalar_lea.vmem %s0, 7
    %v54 = vld [vmem:[%s53] sm:$0x1]
    %55 = vrot.lane.b32.xlu0 %v54, 28
    %v56 = vpop.permute.xlu0 %55
    %vm57 = vcmask 261344
    %58 = vst.msk [vmem:[#allocation0] sm:$0x1] %vm57, %v56
    %s59 = scalar_lea.vmem %s0, 6
    %v60 = vld [vmem:[%s59] sm:$0x1]
    %61 = vrot.lane.b32.xlu0 %v60, 24
    %v62 = vpop.permute.xlu0 %61
    %vm63 = vcmask 228544
    %64 = vst.msk [vmem:[#allocation0] sm:$0x1] %vm63, %v62
    %s65 = scalar_lea.vmem %s0, 5
    %v66 = vld [vmem:[%s65] sm:$0x1]
    %67 = vrot.lane.b32.xlu0 %v66, 20
    %v68 = vpop.permute.xlu0 %67
    %vm69 = vcmask 195744
    %70 = vst.msk [vmem:[#allocation0] sm:$0x1] %vm69, %v68
    %s71 = scalar_lea.vmem %s0, 4
    %v72 = vld [vmem:[%s71] sm:$0x1]
    %73 = vrot.lane.b32.xlu0 %v72, 16
    %v74 = vpop.permute.xlu0 %73
    %vm75 = vcmask 162944
    %76 = vst.msk [vmem:[#allocation0] sm:$0x1] %vm75, %v74
    %s77 = scalar_lea.vmem %s0, 3
    %v78 = vld [vmem:[%s77] sm:$0x1]
    %79 = vrot.lane.b32.xlu0 %v78, 12
    %v80 = vpop.permute.xlu0 %79
    %vm81 = vcmask 130144
    %82 = vst.msk [vmem:[#allocation0] sm:$0x1] %vm81, %v80
    %s83 = scalar_lea.vmem %s0, 2
    %v84 = vld [vmem:[%s83] sm:$0x1]
    %85 = vrot.lane.b32.xlu0 %v84, 8
    %v86 = vpop.permute.xlu0 %85
    %vm87 = vcmask 97344
    %88 = vst.msk [vmem:[#allocation0] sm:$0x1] %vm87, %v86
    %s89 = scalar_lea.vmem %s0, 1
    %v90 = vld [vmem:[%s89] sm:$0x1]
    %91 = vrot.lane.b32.xlu0 %v90, 4
    %v92 = vpop.permute.xlu0 %91
    %vm93 = vcmask 64544
    %94 = vst.msk [vmem:[#allocation0] sm:$0x1] %vm93, %v92
    %s96 = sshllo.u32 0, 1
    %v98 = vld [vmem:[#allocation0] sm:%s96]
    %s99 = sshllo.u32 0, 1
    %100 = vst [vmem:[%s1] sm:%s99] %v98

// kernel: tile.53
$region0: #{tile.53}
  #allocation0 [shape = 's32[1]{0}', space=sflag, size = 0x4, scoped, tag = 'scoped memory for tile.53']
  %s0 = inlined_call_operand.vmem [shape: f32[8], index: 0, kind: input, shape index: {}]
  %s1 = inlined_call_operand.vmem [shape: f32[8,8], index: 1, kind: output, shape index: {}]
  // Predicated region
  $region2: #{tile.53} parent=0 // pred_check
    _
  $region3: #{tile.53} parent=0 // pred_check_branch
    %3 = sbr.rel (0) target = $region5
  $region4: #{tile.53} parent=0 // pred_region
    _
  $region5: #{tile.53} parent=0 // pred_fallthru
    _
  %v4 = vld [vmem:[%s0] ss:$0 sm:$0xff]
  %5 = vst [vmem:[%s1] sm:$0xff] %v4

// kernel: tile.54
$region0: #{tile.54}
  %s0 = inlined_call_operand.vmem [shape: f32[8,8], index: 0, kind: input, shape index: {}]
  %s1 = inlined_call_operand.vmem [shape: f32[1,64], index: 1, kind: output, shape index: {}]
  $region1: #{tile.54} parent=0
    #allocation0 [shape = 'u8[4096]{0}', space=vmem, size = 0x1000, scoped, tag = 'scoped mem for output reshape']
    %v2 = vld [vmem:[%s0] sm:$0x1]
    %vm3 = vcmask 64512
    %4 = vst.msk [vmem:[#allocation0] sm:$0x1] %vm3, %v2
    %s5 = scalar_lea.vmem %s0, 7
    %v6 = vld [vmem:[%s5] sm:$0x1]
    %7 = vrot.lane.b32.xlu0 %v6, 56
    %v8 = vpop.permute.xlu0 %7
    %vm9 = vcmask 523712
    %10 = vst.msk [vmem:[#allocation0] sm:$0x1] %vm9, %v8
    %s11 = scalar_lea.vmem %s0, 6
    %v12 = vld [vmem:[%s11] sm:$0x1]
    %13 = vrot.lane.b32.xlu0 %v12, 48
    %v14 = vpop.permute.xlu0 %13
    %vm15 = vcmask 458112
    %16 = vst.msk [vmem:[#allocation0] sm:$0x1] %vm15, %v14
    %s17 = scalar_lea.vmem %s0, 5
    %v18 = vld [vmem:[%s17] sm:$0x1]
    %19 = vrot.lane.b32.xlu0 %v18, 40
    %v20 = vpop.permute.xlu0 %19
    %vm21 = vcmask 392512
    %22 = vst.msk [vmem:[#allocation0] sm:$0x1] %vm21, %v20
    %s23 = scalar_lea.vmem %s0, 4
    %v24 = vld [vmem:[%s23] sm:$0x1]
    %25 = vrot.lane.b32.xlu0 %v24, 32
    %v26 = vpop.permute.xlu0 %25
    %vm27 = vcmask 326912
    %28 = vst.msk [vmem:[#allocation0] sm:$0x1] %vm27, %v26
    %s29 = scalar_lea.vmem %s0, 3
    %v30 = vld [vmem:[%s29] sm:$0x1]
    %31 = vrot.lane.b32.xlu0 %v30, 24
    %v32 = vpop.permute.xlu0 %31
    %vm33 = vcmask 261312
    %34 = vst.msk [vmem:[#allocation0] sm:$0x1] %vm33, %v32
    %s35 = scalar_lea.vmem %s0, 2
    %v36 = vld [vmem:[%s35] sm:$0x1]
    %37 = vrot.lane.b32.xlu0 %v36, 16
    %v38 = vpop.permute.xlu0 %37
    %vm39 = vcmask 195712
    %40 = vst.msk [vmem:[#allocation0] sm:$0x1] %vm39, %v38
    %s41 = scalar_lea.vmem %s0, 1
    %v42 = vld [vmem:[%s41] sm:$0x1]
    %43 = vrot.lane.b32.xlu0 %v42, 8
    %v44 = vpop.permute.xlu0 %43
    %vm45 = vcmask 130112
    %46 = vst.msk [vmem:[#allocation0] sm:$0x1] %vm45, %v44
    %s48 = sshllo.u32 0, 1
    %v50 = vld [vmem:[#allocation0] sm:%s48]
    %s51 = sshllo.u32 0, 1
    %52 = vst [vmem:[%s1] sm:%s51] %v50

// kernel: tile.58
$region0: #{tile.58}
  #allocation0 [shape = 's32[1]{0}', space=sflag, size = 0x4, scoped, tag = 'scoped memory for tile.58']
  %s0 = inlined_call_operand.vmem [shape: f32[16], index: 0, kind: input, shape index: {}]
  %s1 = inlined_call_operand.vmem [shape: f32[4,16], index: 1, kind: output, shape index: {}]
  // Predicated region
  $region2: #{tile.58} parent=0 // pred_check
    _
  $region3: #{tile.58} parent=0 // pred_check_branch
    %3 = sbr.rel (0) target = $region5
  $region4: #{tile.58} parent=0 // pred_region
    _
  $region5: #{tile.58} parent=0 // pred_fallthru
    _
  %v4 = vld [vmem:[%s0] ss:$0 sm:$0xff]
  %5 = vst [vmem:[%s1] sm:$0xf] %v4

// kernel: tile.59
$region0: #{tile.59}
  %s0 = inlined_call_operand.vmem [shape: f32[4,16], index: 0, kind: input, shape index: {}]
  %s1 = inlined_call_operand.vmem [shape: f32[1,64], index: 1, kind: output, shape index: {}]
  $region1: #{tile.59} parent=0
    #allocation0 [shape = 'u8[4096]{0}', space=vmem, size = 0x1000, scoped, tag = 'scoped mem for output reshape']
    #allocation1 [shape = 'u8[4096]{0}', space=vmem, size = 0x1000, scoped, tag = 'scoped mem for input reshape']
    %s3 = sshllo.u32 0, 4
    %v4 = vld [vmem:[%s0] sm:%s3]
    %5 = vst [vmem:[#allocation1] sm:%s3] %v4
    %v6 = vld [vmem:[#allocation1] sm:$0x1]
    %vm7 = vcmask 130048
    %8 = vst.msk [vmem:[#allocation0] sm:$0x1] %vm7, %v6
    %s9 = scalar_lea.vmem [#allocation1], 3
    %v10 = vld [vmem:[%s9] sm:$0x1]
    %11 = vrot.lane.b32.xlu0 %v10, 48
    %v12 = vpop.permute.xlu0 %11
    %vm13 = vcmask 523648
    %14 = vst.msk [vmem:[#allocation0] sm:$0x1] %vm13, %v12
    %s15 = scalar_lea.vmem [#allocation1], 2
    %v16 = vld [vmem:[%s15] sm:$0x1]
    %17 = vrot.lane.b32.xlu0 %v16, 32
    %v18 = vpop.permute.xlu0 %17
    %vm19 = vcmask 392448
    %20 = vst.msk [vmem:[#allocation0] sm:$0x1] %vm19, %v18
    %s21 = scalar_lea.vmem [#allocation1], 1
    %v22 = vld [vmem:[%s21] sm:$0x1]
    %23 = vrot.lane.b32.xlu0 %v22, 16
    %v24 = vpop.permute.xlu0 %23
    %vm25 = vcmask 261248
    %26 = vst.msk [vmem:[#allocation0] sm:$0x1] %vm25, %v24
    %s28 = sshllo.u32 0, 1
    %v30 = vld [vmem:[#allocation0] sm:%s28]
    %s31 = sshllo.u32 0, 1
    %32 = vst [vmem:[%s1] sm:%s31] %v30

// kernel: illu_generator_forward.1
$region0: #{illu_generator_forward.1}
  #allocation0 [shape = 'u32[]', space=smem, size = 0x4, offset = 0x4, fixed_abs, tag = 'smem constant byte address 0x4 - core index']
  #allocation1 [shape = 'u32[144,128]{1,0:T(1,128)}', space=vmem, size = 0x12000, scoped, tag = 'internal scratch']
  %s0 = inlined_call_operand.vmem [shape: f32[32,48], index: 0, kind: input, shape index: {}]
  %s1 = inlined_call_operand.vmem [shape: bf16[3,48,32], index: 1, kind: input, shape index: {}]
  %s2 = inlined_call_operand.vmem [shape: f32[1,32], index: 2, kind: input, shape index: {}]
  %s3 = inlined_call_operand.vmem [shape: bf16[3,32,32], index: 3, kind: input, shape index: {}]
  %s4 = inlined_call_operand.vmem [shape: f32[1,32], index: 4, kind: input, shape index: {}]
  %s5 = inlined_call_operand.vmem [shape: bf16[2,32,48], index: 5, kind: input, shape index: {}]
  %s6 = inlined_call_operand.vmem [shape: f32[1,48], index: 6, kind: input, shape index: {}]
  %s7 = inlined_call_operand.vmem [shape: bf16[3,48,64], index: 7, kind: input, shape index: {}]
  %s8 = inlined_call_operand.vmem [shape: f32[1,64], index: 8, kind: input, shape index: {}]
  %s9 = inlined_call_operand.vmem [shape: bf16[3,64,64], index: 9, kind: input, shape index: {}]
  %s10 = inlined_call_operand.vmem [shape: f32[1,64], index: 10, kind: input, shape index: {}]
  %s11 = inlined_call_operand.vmem [shape: bf16[3,64,64], index: 11, kind: input, shape index: {}]
  %s12 = inlined_call_operand.vmem [shape: f32[1,64], index: 12, kind: input, shape index: {}]
  %s13 = inlined_call_operand.vmem [shape: f32[32,48], index: 13, kind: output, shape index: {0}]
  %s14 = inlined_call_operand.vmem [shape: f32[32,64], index: 14, kind: output, shape index: {1}]
  %s15 = inlined_call_operand.vmem [shape: f32[16,64], index: 15, kind: output, shape index: {2}]
  %s16 = inlined_call_operand.vmem [shape: f32[8,64], index: 16, kind: output, shape index: {3}]
  %17 = xla_tuple %s13, %s14, %s15, %s16
  %s18 = sld [smem:[#allocation0]]
  $region86: #{illu_generator_forward.1} parent=0
    _
  %s20 = ssub.s32 1, %s18
  %s21 = scalar_select 0, %s20, %s18
  // Predicated region
  $region2: #{illu_generator_forward.1} parent=0 // pred_check
    _
  $region3: #{illu_generator_forward.1} parent=0 // pred_check_branch
    %23 = sbr.rel (0) target = $region5
  $region4: #{illu_generator_forward.1} parent=0 // pred_region
    _
  $region5: #{illu_generator_forward.1} parent=0 // pred_fallthru
    _
  // Predicated region
  $region6: #{illu_generator_forward.1} parent=0 // pred_check
    _
  $region7: #{illu_generator_forward.1} parent=0 // pred_check_branch
    %25 = sbr.rel (0) target = $region9
  $region8: #{illu_generator_forward.1} parent=0 // pred_region
    _
  $region9: #{illu_generator_forward.1} parent=0 // pred_fallthru
    _
  // Predicated region
  $region10: #{illu_generator_forward.1} parent=0 // pred_check
    _
  $region11: #{illu_generator_forward.1} parent=0 // pred_check_branch
    %27 = sbr.rel (0) target = $region13
  $region12: #{illu_generator_forward.1} parent=0 // pred_region
    _
  $region13: #{illu_generator_forward.1} parent=0 // pred_fallthru
    _
  // Predicated region
  $region14: #{illu_generator_forward.1} parent=0 // pred_check
    _
  $region15: #{illu_generator_forward.1} parent=0 // pred_check_branch
    %29 = sbr.rel (0) target = $region17
  $region16: #{illu_generator_forward.1} parent=0 // pred_region
    _
  $region17: #{illu_generator_forward.1} parent=0 // pred_fallthru
    _
  // Predicated region
  $region18: #{illu_generator_forward.1} parent=0 // pred_check
    _
  $region19: #{illu_generator_forward.1} parent=0 // pred_check_branch
    %31 = sbr.rel (0) target = $region21
  $region20: #{illu_generator_forward.1} parent=0 // pred_region
    _
  $region21: #{illu_generator_forward.1} parent=0 // pred_fallthru
    _
  // Predicated region
  $region22: #{illu_generator_forward.1} parent=0 // pred_check
    _
  $region23: #{illu_generator_forward.1} parent=0 // pred_check_branch
    %33 = sbr.rel (0) target = $region25
  $region24: #{illu_generator_forward.1} parent=0 // pred_region
    _
  $region25: #{illu_generator_forward.1} parent=0 // pred_fallthru
    _
  // Predicated region
  $region26: #{illu_generator_forward.1} parent=0 // pred_check
    _
  $region27: #{illu_generator_forward.1} parent=0 // pred_check_branch
    %35 = sbr.rel (0) target = $region29
  $region28: #{illu_generator_forward.1} parent=0 // pred_region
    _
  $region29: #{illu_generator_forward.1} parent=0 // pred_fallthru
    _
  // Predicated region
  $region30: #{illu_generator_forward.1} parent=0 // pred_check
    _
  $region31: #{illu_generator_forward.1} parent=0 // pred_check_branch
    %37 = sbr.rel (0) target = $region33
  $region32: #{illu_generator_forward.1} parent=0 // pred_region
    _
  $region33: #{illu_generator_forward.1} parent=0 // pred_fallthru
    _
  // Predicated region
  $region34: #{illu_generator_forward.1} parent=0 // pred_check
    _
  $region35: #{illu_generator_forward.1} parent=0 // pred_check_branch
    %39 = sbr.rel (0) target = $region37
  $region36: #{illu_generator_forward.1} parent=0 // pred_region
    _
  $region37: #{illu_generator_forward.1} parent=0 // pred_fallthru
    _
  // Predicated region
  $region38: #{illu_generator_forward.1} parent=0 // pred_check
    _
  $region39: #{illu_generator_forward.1} parent=0 // pred_check_branch
    %41 = sbr.rel (0) target = $region41
  $region40: #{illu_generator_forward.1} parent=0 // pred_region
    _
  $region41: #{illu_generator_forward.1} parent=0 // pred_fallthru
    _
  // Predicated region
  $region42: #{illu_generator_forward.1} parent=0 // pred_check
    _
  $region43: #{illu_generator_forward.1} parent=0 // pred_check_branch
    %43 = sbr.rel (0) target = $region45
  $region44: #{illu_generator_forward.1} parent=0 // pred_region
    _
  $region45: #{illu_generator_forward.1} parent=0 // pred_fallthru
    _
  // Predicated region
  $region46: #{illu_generator_forward.1} parent=0 // pred_check
    _
  $region47: #{illu_generator_forward.1} parent=0 // pred_check_branch
    %45 = sbr.rel (0) target = $region49
  $region48: #{illu_generator_forward.1} parent=0 // pred_region
    _
  $region49: #{illu_generator_forward.1} parent=0 // pred_fallthru
    _
  // Predicated region
  $region50: #{illu_generator_forward.1} parent=0 // pred_check
    _
  $region51: #{illu_generator_forward.1} parent=0 // pred_check_branch
    %47 = sbr.rel (0) target = $region53
  $region52: #{illu_generator_forward.1} parent=0 // pred_region
    _
  $region53: #{illu_generator_forward.1} parent=0 // pred_fallthru
    _
  %v49 = vlaneseq
  %v50 = vshrl.u32 %v49, 7
  %v51 = vadd.s32 %v50, 8
  %vm52 = vcmp.lt.s32.totalorder %v50, 0
  %v53 = vsub.s32 0, %v50
  %v54 = vsel %vm52, %v53, %v50
  %v55 = vshrl.u32 %v54, 3
  %v56 = vand.u32 %v54, 7
  %v57 = vsub.s32 0, %v56
  %v58 = vsel %vm52, %v57, %v56
  %vm59 = vcmp.lt.s32.totalorder %v51, 0
  %v60 = vsub.s32 0, %v51
  %v61 = vsel %vm59, %v60, %v51
  %v62 = vshrl.u32 %v61, 3
  %v63 = vand.u32 %v61, 7
  %v64 = vsub.s32 0, %v63
  %v65 = vsel %vm59, %v64, %v63
  %vm66 = vcmp.ne.s32.totalorder %v58, 0
  %vm67 = vcmp.ne.s32.totalorder %v65, 0
  %vm68 = vcmp.lt.s32.totalorder %v58, 0
  %vm69 = vcmp.lt.s32.totalorder %v65, 0
  %vm70 = vmand %vm68, %vm66
  %vm71 = vmand %vm69, %vm67
  %v72 = vadd.s32 %v58, 8
  %v73 = vadd.s32 %v65, 8
  %v74 = vsel %vm70, %v72, %v58
  %v75 = vsel %vm71, %v73, %v65
  %vm76 = vcmp.ne.s32.totalorder %v74, 0
  %vm77 = vcmp.ne.s32.totalorder %v75, 0
  %v78 = vsel %vm76, 1, 0
  %v79 = vsel %vm77, 1, 0
  %v80 = vcvt.s32.f32 %v78
  %v81 = vcvt.s32.f32 %v79
  %v82 = vpack.c.bf16 %v81, %v80
  %vm83 = vcmp.ne.s32.totalorder %v74, 7
  %vm84 = vcmp.ne.s32.totalorder %v75, 7
  %v85 = vsel %vm83, 1, 0
  %v86 = vsel %vm84, 1, 0
  %v87 = vcvt.s32.f32 %v85
  %v88 = vcvt.s32.f32 %v86
  %v89 = vpack.c.bf16 %v88, %v87
  %v90 = vadd.s32 %v50, 16
  %v91 = vadd.s32 %v50, 24
  %vm92 = vcmp.lt.s32.totalorder %v50, 0
  %v93 = vsub.s32 0, %v50
  %v94 = vsel %vm92, %v93, %v50
  %v95 = vshrl.u32 %v94, 4
  %v96 = vand.u32 %v94, 15
  %v97 = vsub.s32 0, %v96
  %v98 = vsel %vm92, %v97, %v96
  %vm99 = vcmp.lt.s32.totalorder %v51, 0
  %v100 = vsub.s32 0, %v51
  %v101 = vsel %vm99, %v100, %v51
  %v102 = vshrl.u32 %v101, 4
  %v103 = vand.u32 %v101, 15
  %v104 = vsub.s32 0, %v103
  %v105 = vsel %vm99, %v104, %v103
  %vm106 = vcmp.lt.s32.totalorder %v90, 0
  %v107 = vsub.s32 0, %v90
  %v108 = vsel %vm106, %v107, %v90
  %v109 = vshrl.u32 %v108, 4
  %v110 = vand.u32 %v108, 15
  %v111 = vsub.s32 0, %v110
  %v112 = vsel %vm106, %v111, %v110
  %vm113 = vcmp.lt.s32.totalorder %v91, 0
  %v114 = vsub.s32 0, %v91
  %v115 = vsel %vm113, %v114, %v91
  %v116 = vshrl.u32 %v115, 4
  %v117 = vand.u32 %v115, 15
  %v118 = vsub.s32 0, %v117
  %v119 = vsel %vm113, %v118, %v117
  %vm120 = vcmp.ne.s32.totalorder %v98, 0
  %vm121 = vcmp.ne.s32.totalorder %v105, 0
  %vm122 = vcmp.ne.s32.totalorder %v112, 0
  %vm123 = vcmp.ne.s32.totalorder %v119, 0
  %vm124 = vcmp.lt.s32.totalorder %v98, 0
  %vm125 = vcmp.lt.s32.totalorder %v105, 0
  %vm126 = vcmp.lt.s32.totalorder %v112, 0
  %vm127 = vcmp.lt.s32.totalorder %v119, 0
  %vm128 = vmand %vm124, %vm120
  %vm129 = vmand %vm125, %vm121
  %vm130 = vmand %vm126, %vm122
  %vm131 = vmand %vm127, %vm123
  %v132 = vadd.s32 %v98, 16
  %v133 = vadd.s32 %v105, 16
  %v134 = vadd.s32 %v112, 16
  %v135 = vadd.s32 %v119, 16
  %v136 = vsel %vm128, %v132, %v98
  %v137 = vsel %vm129, %v133, %v105
  %v138 = vsel %vm130, %v134, %v112
  %v139 = vsel %vm131, %v135, %v119
  %vm140 = vcmp.ne.s32.totalorder %v136, 0
  %vm141 = vcmp.ne.s32.totalorder %v137, 0
  %vm142 = vcmp.ne.s32.totalorder %v138, 0
  %vm143 = vcmp.ne.s32.totalorder %v139, 0
  %v144 = vsel %vm140, 1, 0
  %v145 = vsel %vm141, 1, 0
  %v146 = vsel %vm142, 1, 0
  %v147 = vsel %vm143, 1, 0
  %v148 = vcvt.s32.f32 %v144
  %v149 = vcvt.s32.f32 %v145
  %v150 = vcvt.s32.f32 %v146
  %v151 = vcvt.s32.f32 %v147
  %v152 = vpack.c.bf16 %v149, %v148
  %v153 = vpack.c.bf16 %v151, %v150
  %vm154 = vcmp.ne.s32.totalorder %v136, 15
  %vm155 = vcmp.ne.s32.totalorder %v137, 15
  %vm156 = vcmp.ne.s32.totalorder %v138, 15
  %vm157 = vcmp.ne.s32.totalorder %v139, 15
  %v158 = vsel %vm154, 1, 0
  %v159 = vsel %vm155, 1, 0
  %v160 = vsel %vm156, 1, 0
  %v161 = vsel %vm157, 1, 0
  %v162 = vcvt.s32.f32 %v158
  %v163 = vcvt.s32.f32 %v159
  %v164 = vcvt.s32.f32 %v160
  %v165 = vcvt.s32.f32 %v161
  %v166 = vpack.c.bf16 %v163, %v162
  %v167 = vpack.c.bf16 %v165, %v164
  %vm168 = vcmp.lt.s32.totalorder %v50, 0
  %v169 = vsub.s32 0, %v50
  %v170 = vsel %vm168, %v169, %v50
  %v171 = vshrl.u32 %v170, 2
  %v172 = vand.u32 %v170, 3
  %v173 = vsub.s32 0, %v172
  %v174 = vsel %vm168, %v173, %v172
  %vm175 = vcmp.ne.s32.totalorder %v174, 0
  %vm176 = vcmp.lt.s32.totalorder %v174, 0
  %vm177 = vmand %vm176, %vm175
  %v178 = vadd.s32 %v174, 4
  %v179 = vsel %vm177, %v178, %v174
  %vm180 = vcmp.ne.s32.totalorder %v179, 0
  %v181 = vsel %vm180, 1, 0
  %v182 = vcvt.s32.f32 %v181
  %v183 = vpack.c.bf16 %v182, %v182
  %v184 = vld [vmem:[%s0] ss:$2 sm:$0xff]
  %s185 = scalar_lea.vmem %s0, 16
  %v186 = vld [vmem:[%s185] ss:$2 sm:$0xff]
  %v187 = vpack.c.bf16 %v186, %v184
  %s188 = scalar_lea.vmem %s0, 1
  %v189 = vld [vmem:[%s188] ss:$2 sm:$0xff]
  %s190 = scalar_lea.vmem %s0, 17
  %v191 = vld [vmem:[%s190] ss:$2 sm:$0xff]
  %v192 = vpack.c.bf16 %v191, %v189
  %v194 = vshrl.u32 %v192, 16
  %v196 = vrot.slane %v194, 7
  %v198 = vshll.u32 %v192, 16
  %v200 = vor.u32 %v196, %v198
  %vm202 = vcmask 1040384
  %vm203 = vsmask.f32 256
  %vm204 = vmand %vm202, %vm203
  %v205 = vsel %vm204, %v196, %v200
  %v206 = vmul.bf16 %v205, %v82
  %v207 = vld [vmem:[%s1] sm:$0xf]
  %v208 = vld [vmem:[%s1 + $0x4] sm:$0xf]
  %v209 = vld [vmem:[%s1 + $0x8] sm:$0xf]
  %v210 = vld [vmem:[%s1 + $0xc] sm:$0xf]
  %v211 = vld [vmem:[%s1 + $0x10] sm:$0xf]
  %v212 = vld [vmem:[%s1 + $0x14] sm:$0xf]
  %s213 = scalar_lea.vmem %s1, 24
  %v214 = vld [vmem:[%s213] sm:$0xf]
  %v215 = vld [vmem:[%s213 + $0x4] sm:$0xf]
  %v216 = vld [vmem:[%s213 + $0x8] sm:$0xf]
  %v217 = vld [vmem:[%s213 + $0xc] sm:$0xf]
  %v218 = vld [vmem:[%s213 + $0x10] sm:$0xf]
  %v219 = vld [vmem:[%s213 + $0x14] sm:$0xf]
  %v226 = vunpack.c.l.b16 %v214
  %v227 = vunpack.c.l.b16 %v215
  %v228 = vunpack.c.l.b16 %v216
  %v229 = vunpack.c.l.b16 %v217
  %v230 = vunpack.c.l.b16 %v218
  %v231 = vunpack.c.l.b16 %v219
  %v232 = vpack.c.b16 %v227, %v226
  %v233 = vpack.c.b16 %v229, %v228
  %v234 = vpack.c.b16 %v231, %v230
  %vm238 = vcmask 392192
  %v240 = vsel %vm238, %v187, 0
  %242 = vmatprep.subr.bf16.mxu0 0
  %243 = vmatpush1.bf16.msra.mxu0 %v232
  %244 = vmatprep.subr.bf16.mxu0 0
  %245 = vmatpush1.bf16.msra.mxu0 %v233
  %246 = vmatprep.subr.bf16.mxu0 0
  %247 = vmatpush1.bf16.msra.mxu0 %v234
  %248 = vmatprep.subr.bf16.mxu0 0
  %249 = vmatpush1.bf16.msra.mxu0 0
  %250 = vmatprep.subr.bf16.mxu0 0
  %251 = vmatpush1.bf16.msra.mxu0 0
  %252 = vmatprep.subr.bf16.mxu0 0
  %253 = vmatpush1.bf16.msra.mxu0 0
  %254 = vmatprep.subr.bf16.mxu0 0
  %255 = vmatpush1.bf16.msra.mxu0 0
  %256 = vmatprep.subr.bf16.mxu0 0
  %257 = vmatpush1.bf16.msra.mxu0 0
  %258 = vmatprep.subr.bf16.mxu0 0
  %259 = vmatpush1.bf16.msra.mxu0 0
  %260 = vmatprep.subr.bf16.mxu0 0
  %261 = vmatpush1.bf16.msra.mxu0 0
  %262 = vmatprep.subr.bf16.mxu0 0
  %263 = vmatpush1.bf16.msra.mxu0 0
  %264 = vmatprep.subr.bf16.mxu0 0
  %265 = vmatpush1.bf16.msra.mxu0 0
  %266 = vmatprep.subr.bf16.mxu0 0
  %267 = vmatpush1.bf16.msra.mxu0 0
  %268 = vmatprep.subr.bf16.mxu0 0
  %269 = vmatpush1.bf16.msra.mxu0 0
  %270 = vmatprep.subr.bf16.mxu0 0
  %271 = vmatpush1.bf16.msra.mxu0 0
  %272 = vmatprep.subr.bf16.mxu0 0
  %273 = vmatpush1.bf16.msra.mxu0 0
  %274 = vmatprep.mubr.bf16.mxu0 0
  %275 = vmatmul.mubr.bf16.gmra.mrb[0].mxu0 %v240
  %v276 = vpop.f32.mrb[0].mxu0
  %v277 = vadd.f32 0.0, %v276
  %v278 = vpop.f32.mrb[0].mxu0
  %v279 = vpop.f32.mrb[0].mxu0
  %v280 = vadd.f32 0.0, %v279
  %v281 = vpop.f32.mrb[0].mxu0
  %282 = vdwg.mxu0
  %v289 = vunpack.c.l.b16 %v207
  %v290 = vunpack.c.l.b16 %v208
  %v291 = vunpack.c.l.b16 %v209
  %v292 = vunpack.c.l.b16 %v210
  %v293 = vunpack.c.l.b16 %v211
  %v294 = vunpack.c.l.b16 %v212
  %v295 = vpack.c.b16 %v290, %v289
  %v296 = vpack.c.b16 %v292, %v291
  %v297 = vpack.c.b16 %v294, %v293
  %v302 = vsel %vm238, %v206, 0
  %304 = vmatprep.subr.bf16.mxu0 0
  %305 = vmatpush1.bf16.msra.mxu0 %v295
  %306 = vmatprep.subr.bf16.mxu0 0
  %307 = vmatpush1.bf16.msra.mxu0 %v296
  %308 = vmatprep.subr.bf16.mxu0 0
  %309 = vmatpush1.bf16.msra.mxu0 %v297
  %310 = vmatprep.subr.bf16.mxu0 0
  %311 = vmatpush1.bf16.msra.mxu0 0
  %312 = vmatprep.subr.bf16.mxu0 0
  %313 = vmatpush1.bf16.msra.mxu0 0
  %314 = vmatprep.subr.bf16.mxu0 0
  %315 = vmatpush1.bf16.msra.mxu0 0
  %316 = vmatprep.subr.bf16.mxu0 0
  %317 = vmatpush1.bf16.msra.mxu0 0
  %318 = vmatprep.subr.bf16.mxu0 0
  %319 = vmatpush1.bf16.msra.mxu0 0
  %320 = vmatprep.subr.bf16.mxu0 0
  %321 = vmatpush1.bf16.msra.mxu0 0
  %322 = vmatprep.subr.bf16.mxu0 0
  %323 = vmatpush1.bf16.msra.mxu0 0
  %324 = vmatprep.subr.bf16.mxu0 0
  %325 = vmatpush1.bf16.msra.mxu0 0
  %326 = vmatprep.subr.bf16.mxu0 0
  %327 = vmatpush1.bf16.msra.mxu0 0
  %328 = vmatprep.subr.bf16.mxu0 0
  %329 = vmatpush1.bf16.msra.mxu0 0
  %330 = vmatprep.subr.bf16.mxu0 0
  %331 = vmatpush1.bf16.msra.mxu0 0
  %332 = vmatprep.subr.bf16.mxu0 0
  %333 = vmatpush1.bf16.msra.mxu0 0
  %334 = vmatprep.subr.bf16.mxu0 0
  %335 = vmatpush1.bf16.msra.mxu0 0
  %336 = vmatprep.mubr.bf16.mxu0 0
  %337 = vmatmul.mubr.bf16.gmra.mrb[0].mxu0 %v302
  %v338 = vpop.f32.mrb[0].mxu0
  %v339 = vadd.f32 %v277, %v338
  %v340 = vpop.f32.mrb[0].mxu0
  %v341 = vpop.f32.mrb[0].mxu0
  %v342 = vadd.f32 %v280, %v341
  %v343 = vpop.f32.mrb[0].mxu0
  %344 = vdwg.mxu0
  %s345 = scalar_lea.vmem %s1, 48
  %v346 = vld [vmem:[%s345] sm:$0xf]
  %v347 = vld [vmem:[%s345 + $0x4] sm:$0xf]
  %v348 = vld [vmem:[%s345 + $0x8] sm:$0xf]
  %v349 = vld [vmem:[%s345 + $0xc] sm:$0xf]
  %v350 = vld [vmem:[%s345 + $0x10] sm:$0xf]
  %v351 = vld [vmem:[%s345 + $0x14] sm:$0xf]
  %v358 = vunpack.c.l.b16 %v346
  %v359 = vunpack.c.l.b16 %v347
  %v360 = vunpack.c.l.b16 %v348
  %v361 = vunpack.c.l.b16 %v349
  %v362 = vunpack.c.l.b16 %v350
  %v363 = vunpack.c.l.b16 %v351
  %v364 = vpack.c.b16 %v359, %v358
  %v365 = vpack.c.b16 %v361, %v360
  %v366 = vpack.c.b16 %v363, %v362
  %v370 = vsel %vm238, %v192, 0
  %372 = vmatprep.subr.bf16.mxu0 0
  %373 = vmatpush1.bf16.msra.mxu0 %v364
  %374 = vmatprep.subr.bf16.mxu0 0
  %375 = vmatpush1.bf16.msra.mxu0 %v365
  %376 = vmatprep.subr.bf16.mxu0 0
  %377 = vmatpush1.bf16.msra.mxu0 %v366
  %378 = vmatprep.subr.bf16.mxu0 0
  %379 = vmatpush1.bf16.msra.mxu0 0
  %380 = vmatprep.subr.bf16.mxu0 0
  %381 = vmatpush1.bf16.msra.mxu0 0
  %382 = vmatprep.subr.bf16.mxu0 0
  %383 = vmatpush1.bf16.msra.mxu0 0
  %384 = vmatprep.subr.bf16.mxu0 0
  %385 = vmatpush1.bf16.msra.mxu0 0
  %386 = vmatprep.subr.bf16.mxu0 0
  %387 = vmatpush1.bf16.msra.mxu0 0
  %388 = vmatprep.subr.bf16.mxu0 0
  %389 = vmatpush1.bf16.msra.mxu0 0
  %390 = vmatprep.subr.bf16.mxu0 0
  %391 = vmatpush1.bf16.msra.mxu0 0
  %392 = vmatprep.subr.bf16.mxu0 0
  %393 = vmatpush1.bf16.msra.mxu0 0
  %394 = vmatprep.subr.bf16.mxu0 0
  %395 = vmatpush1.bf16.msra.mxu0 0
  %396 = vmatprep.subr.bf16.mxu0 0
  %397 = vmatpush1.bf16.msra.mxu0 0
  %398 = vmatprep.subr.bf16.mxu0 0
  %399 = vmatpush1.bf16.msra.mxu0 0
  %400 = vmatprep.subr.bf16.mxu0 0
  %401 = vmatpush1.bf16.msra.mxu0 0
  %402 = vmatprep.subr.bf16.mxu0 0
  %403 = vmatpush1.bf16.msra.mxu0 0
  %404 = vmatprep.mubr.bf16.mxu0 0
  %405 = vmatmul.mubr.bf16.gmra.mrb[0].mxu0 %v370
  %v406 = vpop.f32.mrb[0].mxu0
  %v407 = vadd.f32 0.0, %v406
  %v408 = vpop.f32.mrb[0].mxu0
  %v409 = vpop.f32.mrb[0].mxu0
  %v410 = vadd.f32 0.0, %v409
  %v411 = vpop.f32.mrb[0].mxu0
  %412 = vdwg.mxu0
  %v413 = vadd.f32 %v339, %v407
  %v414 = vadd.f32 %v342, %v410
  %v415 = vld [vmem:[%s2] sm:$0x1]
  %v417 = vlaneseq
  %v418 = vshrl.u32 %v417, 7
  %v419 = vsub.s32 0, %v418
  %v420 = vrot.slane %v415, %v419
  %v422 = vadd.f32 %v413, %v420
  %v423 = vadd.f32 %v414, %v420
  %v424 = vmul.f32 %v422, 0.2
  %v425 = vmul.f32 %v423, 0.2
  %v426 = vmax.f32 %v422, %v424
  %v427 = vmax.f32 %v423, %v425
  %v428 = vpack.c.bf16 %v427, %v426
  %v430 = vshrl.u32 %v428, 16
  %v432 = vrot.slane %v430, 7
  %v434 = vshll.u32 %v428, 16
  %v436 = vor.u32 %v432, %v434
  %v438 = vsel %vm204, %v432, %v436
  %v439 = vmul.bf16 %v438, %v82
  %v440 = vld [vmem:[%s3] sm:$0xf]
  %v441 = vld [vmem:[%s3 + $0x4] sm:$0xf]
  %v442 = vld [vmem:[%s3 + $0x8] sm:$0xf]
  %v443 = vld [vmem:[%s3 + $0xc] sm:$0xf]
  %s444 = scalar_lea.vmem %s3, 16
  %v445 = vld [vmem:[%s444] sm:$0xf]
  %v446 = vld [vmem:[%s444 + $0x4] sm:$0xf]
  %v447 = vld [vmem:[%s444 + $0x8] sm:$0xf]
  %v448 = vld [vmem:[%s444 + $0xc] sm:$0xf]
  %v453 = vunpack.c.l.b16 %v445
  %v454 = vunpack.c.l.b16 %v446
  %v455 = vunpack.c.l.b16 %v447
  %v456 = vunpack.c.l.b16 %v448
  %v457 = vpack.c.b16 %v454, %v453
  %v458 = vpack.c.b16 %v456, %v455
  %vm461 = vcmask 261120
  %v462 = vsel %vm461, %v428, 0
  %464 = vmatprep.subr.bf16.mxu0 0
  %465 = vmatpush1.bf16.msra.mxu0 %v457
  %466 = vmatprep.subr.bf16.mxu0 0
  %467 = vmatpush1.bf16.msra.mxu0 %v458
  %468 = vmatprep.subr.bf16.mxu0 0
  %469 = vmatpush1.bf16.msra.mxu0 0
  %470 = vmatprep.subr.bf16.mxu0 0
  %471 = vmatpush1.bf16.msra.mxu0 0
  %472 = vmatprep.subr.bf16.mxu0 0
  %473 = vmatpush1.bf16.msra.mxu0 0
  %474 = vmatprep.subr.bf16.mxu0 0
  %475 = vmatpush1.bf16.msra.mxu0 0
  %476 = vmatprep.subr.bf16.mxu0 0
  %477 = vmatpush1.bf16.msra.mxu0 0
  %478 = vmatprep.subr.bf16.mxu0 0
  %479 = vmatpush1.bf16.msra.mxu0 0
  %480 = vmatprep.subr.bf16.mxu0 0
  %481 = vmatpush1.bf16.msra.mxu0 0
  %482 = vmatprep.subr.bf16.mxu0 0
  %483 = vmatpush1.bf16.msra.mxu0 0
  %484 = vmatprep.subr.bf16.mxu0 0
  %485 = vmatpush1.bf16.msra.mxu0 0
  %486 = vmatprep.subr.bf16.mxu0 0
  %487 = vmatpush1.bf16.msra.mxu0 0
  %488 = vmatprep.subr.bf16.mxu0 0
  %489 = vmatpush1.bf16.msra.mxu0 0
  %490 = vmatprep.subr.bf16.mxu0 0
  %491 = vmatpush1.bf16.msra.mxu0 0
  %492 = vmatprep.subr.bf16.mxu0 0
  %493 = vmatpush1.bf16.msra.mxu0 0
  %494 = vmatprep.subr.bf16.mxu0 0
  %495 = vmatpush1.bf16.msra.mxu0 0
  %496 = vmatprep.mubr.bf16.mxu0 0
  %497 = vmatmul.mubr.bf16.gmra.mrb[0].mxu0 %v462
  %v498 = vpop.f32.mrb[0].mxu0
  %v499 = vadd.f32 0.0, %v498
  %v500 = vpop.f32.mrb[0].mxu0
  %v501 = vpop.f32.mrb[0].mxu0
  %v502 = vadd.f32 0.0, %v501
  %v503 = vpop.f32.mrb[0].mxu0
  %504 = vdwg.mxu0
  %v509 = vunpack.c.l.b16 %v440
  %v510 = vunpack.c.l.b16 %v441
  %v511 = vunpack.c.l.b16 %v442
  %v512 = vunpack.c.l.b16 %v443
  %v513 = vpack.c.b16 %v510, %v509
  %v514 = vpack.c.b16 %v512, %v511
  %v518 = vsel %vm461, %v439, 0
  %520 = vmatprep.subr.bf16.mxu0 0
  %521 = vmatpush1.bf16.msra.mxu0 %v513
  %522 = vmatprep.subr.bf16.mxu0 0
  %523 = vmatpush1.bf16.msra.mxu0 %v514
  %524 = vmatprep.subr.bf16.mxu0 0
  %525 = vmatpush1.bf16.msra.mxu0 0
  %526 = vmatprep.subr.bf16.mxu0 0
  %527 = vmatpush1.bf16.msra.mxu0 0
  %528 = vmatprep.subr.bf16.mxu0 0
  %529 = vmatpush1.bf16.msra.mxu0 0
  %530 = vmatprep.subr.bf16.mxu0 0
  %531 = vmatpush1.bf16.msra.mxu0 0
  %532 = vmatprep.subr.bf16.mxu0 0
  %533 = vmatpush1.bf16.msra.mxu0 0
  %534 = vmatprep.subr.bf16.mxu0 0
  %535 = vmatpush1.bf16.msra.mxu0 0
  %536 = vmatprep.subr.bf16.mxu0 0
  %537 = vmatpush1.bf16.msra.mxu0 0
  %538 = vmatprep.subr.bf16.mxu0 0
  %539 = vmatpush1.bf16.msra.mxu0 0
  %540 = vmatprep.subr.bf16.mxu0 0
  %541 = vmatpush1.bf16.msra.mxu0 0
  %542 = vmatprep.subr.bf16.mxu0 0
  %543 = vmatpush1.bf16.msra.mxu0 0
  %544 = vmatprep.subr.bf16.mxu0 0
  %545 = vmatpush1.bf16.msra.mxu0 0
  %546 = vmatprep.subr.bf16.mxu0 0
  %547 = vmatpush1.bf16.msra.mxu0 0
  %548 = vmatprep.subr.bf16.mxu0 0
  %549 = vmatpush1.bf16.msra.mxu0 0
  %550 = vmatprep.subr.bf16.mxu0 0
  %551 = vmatpush1.bf16.msra.mxu0 0
  %552 = vmatprep.mubr.bf16.mxu0 0
  %553 = vmatmul.mubr.bf16.gmra.mrb[0].mxu0 %v518
  %v554 = vpop.f32.mrb[0].mxu0
  %v555 = vadd.f32 %v499, %v554
  %v556 = vpop.f32.mrb[0].mxu0
  %v557 = vpop.f32.mrb[0].mxu0
  %v558 = vadd.f32 %v502, %v557
  %v559 = vpop.f32.mrb[0].mxu0
  %560 = vdwg.mxu0
  %v561 = vrot.slane %v434, 1
  %v562 = vor.u32 %v430, %v561
  %vm565 = vcmask 1047552
  %vm566 = vsmask.f32 7424
  %vm567 = vmand %vm565, %vm566
  %v568 = vsel %vm567, %v562, %v561
  %v569 = vmul.bf16 %v568, %v89
  %s570 = scalar_lea.vmem %s3, 32
  %v571 = vld [vmem:[%s570] sm:$0xf]
  %v572 = vld [vmem:[%s570 + $0x4] sm:$0xf]
  %v573 = vld [vmem:[%s570 + $0x8] sm:$0xf]
  %v574 = vld [vmem:[%s570 + $0xc] sm:$0xf]
  %v579 = vunpack.c.l.b16 %v571
  %v580 = vunpack.c.l.b16 %v572
  %v581 = vunpack.c.l.b16 %v573
  %v582 = vunpack.c.l.b16 %v574
  %v583 = vpack.c.b16 %v580, %v579
  %v584 = vpack.c.b16 %v582, %v581
  %v588 = vsel %vm461, %v569, 0
  %590 = vmatprep.subr.bf16.mxu0 0
  %591 = vmatpush1.bf16.msra.mxu0 %v583
  %592 = vmatprep.subr.bf16.mxu0 0
  %593 = vmatpush1.bf16.msra.mxu0 %v584
  %594 = vmatprep.subr.bf16.mxu0 0
  %595 = vmatpush1.bf16.msra.mxu0 0
  %596 = vmatprep.subr.bf16.mxu0 0
  %597 = vmatpush1.bf16.msra.mxu0 0
  %598 = vmatprep.subr.bf16.mxu0 0
  %599 = vmatpush1.bf16.msra.mxu0 0
  %600 = vmatprep.subr.bf16.mxu0 0
  %601 = vmatpush1.bf16.msra.mxu0 0
  %602 = vmatprep.subr.bf16.mxu0 0
  %603 = vmatpush1.bf16.msra.mxu0 0
  %604 = vmatprep.subr.bf16.mxu0 0
  %605 = vmatpush1.bf16.msra.mxu0 0
  %606 = vmatprep.subr.bf16.mxu0 0
  %607 = vmatpush1.bf16.msra.mxu0 0
  %608 = vmatprep.subr.bf16.mxu0 0
  %609 = vmatpush1.bf16.msra.mxu0 0
  %610 = vmatprep.subr.bf16.mxu0 0
  %611 = vmatpush1.bf16.msra.mxu0 0
  %612 = vmatprep.subr.bf16.mxu0 0
  %613 = vmatpush1.bf16.msra.mxu0 0
  %614 = vmatprep.subr.bf16.mxu0 0
  %615 = vmatpush1.bf16.msra.mxu0 0
  %616 = vmatprep.subr.bf16.mxu0 0
  %617 = vmatpush1.bf16.msra.mxu0 0
  %618 = vmatprep.subr.bf16.mxu0 0
  %619 = vmatpush1.bf16.msra.mxu0 0
  %620 = vmatprep.subr.bf16.mxu0 0
  %621 = vmatpush1.bf16.msra.mxu0 0
  %622 = vmatprep.mubr.bf16.mxu0 0
  %623 = vmatmul.mubr.bf16.gmra.mrb[0].mxu0 %v588
  %v624 = vpop.f32.mrb[0].mxu0
  %v625 = vadd.f32 0.0, %v624
  %v626 = vpop.f32.mrb[0].mxu0
  %v627 = vpop.f32.mrb[0].mxu0
  %v628 = vadd.f32 0.0, %v627
  %v629 = vpop.f32.mrb[0].mxu0
  %630 = vdwg.mxu0
  %v631 = vadd.f32 %v555, %v625
  %v632 = vadd.f32 %v558, %v628
  %v633 = vld [vmem:[%s4] sm:$0x1]
  %v635 = vlaneseq
  %v636 = vshrl.u32 %v635, 7
  %v637 = vsub.s32 0, %v636
  %v638 = vrot.slane %v633, %v637
  %v640 = vadd.f32 %v631, %v638
  %v641 = vadd.f32 %v632, %v638
  %v642 = vmul.f32 %v640, 0.2
  %v643 = vmul.f32 %v641, 0.2
  %v644 = vmax.f32 %v640, %v642
  %v645 = vmax.f32 %v641, %v643
  %v646 = vpack.c.bf16 %v645, %v644
  %v647 = vld [vmem:[%s5] sm:$0xf]
  %v648 = vld [vmem:[%s5 + $0x4] sm:$0xf]
  %v649 = vld [vmem:[%s5 + $0x8] sm:$0xf]
  %v650 = vld [vmem:[%s5 + $0xc] sm:$0xf]
  %v651 = vld [vmem:[%s6] sm:$0x1]
  %v653 = vlaneseq
  %v654 = vshrl.u32 %v653, 7
  %v655 = vsub.s32 0, %v654
  %v656 = vrot.slane %v651, %v655
  %v662 = vunpack.c.l.b16 %v647
  %v663 = vunpack.c.l.b16 %v648
  %v664 = vunpack.c.l.b16 %v649
  %v665 = vunpack.c.l.b16 %v650
  %v666 = vpack.c.b16 %v663, %v662
  %v667 = vpack.c.b16 %v665, %v664
  %v671 = vsel %vm461, %v646, 0
  %673 = vmatprep.subr.bf16.mxu0 0
  %674 = vmatpush1.bf16.msra.mxu0 %v666
  %675 = vmatprep.subr.bf16.mxu0 0
  %676 = vmatpush1.bf16.msra.mxu0 %v667
  %677 = vmatprep.subr.bf16.mxu0 0
  %678 = vmatpush1.bf16.msra.mxu0 0
  %679 = vmatprep.subr.bf16.mxu0 0
  %680 = vmatpush1.bf16.msra.mxu0 0
  %681 = vmatprep.subr.bf16.mxu0 0
  %682 = vmatpush1.bf16.msra.mxu0 0
  %683 = vmatprep.subr.bf16.mxu0 0
  %684 = vmatpush1.bf16.msra.mxu0 0
  %685 = vmatprep.subr.bf16.mxu0 0
  %686 = vmatpush1.bf16.msra.mxu0 0
  %687 = vmatprep.subr.bf16.mxu0 0
  %688 = vmatpush1.bf16.msra.mxu0 0
  %689 = vmatprep.subr.bf16.mxu0 0
  %690 = vmatpush1.bf16.msra.mxu0 0
  %691 = vmatprep.subr.bf16.mxu0 0
  %692 = vmatpush1.bf16.msra.mxu0 0
  %693 = vmatprep.subr.bf16.mxu0 0
  %694 = vmatpush1.bf16.msra.mxu0 0
  %695 = vmatprep.subr.bf16.mxu0 0
  %696 = vmatpush1.bf16.msra.mxu0 0
  %697 = vmatprep.subr.bf16.mxu0 0
  %698 = vmatpush1.bf16.msra.mxu0 0
  %699 = vmatprep.subr.bf16.mxu0 0
  %700 = vmatpush1.bf16.msra.mxu0 0
  %701 = vmatprep.subr.bf16.mxu0 0
  %702 = vmatpush1.bf16.msra.mxu0 0
  %703 = vmatprep.subr.bf16.mxu0 0
  %704 = vmatpush1.bf16.msra.mxu0 0
  %705 = vmatprep.mubr.bf16.mxu0 0
  %706 = vmatmul.mubr.bf16.gmra.mrb[0].mxu0 %v671
  %v707 = vpop.f32.mrb[0].mxu0
  %v708 = vadd.f32 %v656, %v707
  %v709 = vpop.f32.mrb[0].mxu0
  %v710 = vpop.f32.mrb[0].mxu0
  %v711 = vadd.f32 %v656, %v710
  %v712 = vpop.f32.mrb[0].mxu0
  %713 = vdwg.mxu0
  %v714 = vmul.f32 %v708, 0.2
  %v715 = vmul.f32 %v711, 0.2
  %v716 = vmax.f32 %v708, %v714
  %v717 = vmax.f32 %v711, %v715
  %s718 = scalar_lea.vmem %s5, 16
  %v719 = vld [vmem:[%s718] sm:$0xf]
  %v720 = vld [vmem:[%s718 + $0x4] sm:$0xf]
  %v721 = vld [vmem:[%s718 + $0x8] sm:$0xf]
  %v722 = vld [vmem:[%s718 + $0xc] sm:$0xf]
  %v727 = vunpack.c.l.b16 %v719
  %v728 = vunpack.c.l.b16 %v720
  %v729 = vunpack.c.l.b16 %v721
  %v730 = vunpack.c.l.b16 %v722
  %v731 = vpack.c.b16 %v728, %v727
  %v732 = vpack.c.b16 %v730, %v729
  %735 = vmatprep.subr.bf16.mxu0 0
  %736 = vmatpush1.bf16.msra.mxu0 %v731
  %737 = vmatprep.subr.bf16.mxu0 0
  %738 = vmatpush1.bf16.msra.mxu0 %v732
  %739 = vmatprep.subr.bf16.mxu0 0
  %740 = vmatpush1.bf16.msra.mxu0 0
  %741 = vmatprep.subr.bf16.mxu0 0
  %742 = vmatpush1.bf16.msra.mxu0 0
  %743 = vmatprep.subr.bf16.mxu0 0
  %744 = vmatpush1.bf16.msra.mxu0 0
  %745 = vmatprep.subr.bf16.mxu0 0
  %746 = vmatpush1.bf16.msra.mxu0 0
  %747 = vmatprep.subr.bf16.mxu0 0
  %748 = vmatpush1.bf16.msra.mxu0 0
  %749 = vmatprep.subr.bf16.mxu0 0
  %750 = vmatpush1.bf16.msra.mxu0 0
  %751 = vmatprep.subr.bf16.mxu0 0
  %752 = vmatpush1.bf16.msra.mxu0 0
  %753 = vmatprep.subr.bf16.mxu0 0
  %754 = vmatpush1.bf16.msra.mxu0 0
  %755 = vmatprep.subr.bf16.mxu0 0
  %756 = vmatpush1.bf16.msra.mxu0 0
  %757 = vmatprep.subr.bf16.mxu0 0
  %758 = vmatpush1.bf16.msra.mxu0 0
  %759 = vmatprep.subr.bf16.mxu0 0
  %760 = vmatpush1.bf16.msra.mxu0 0
  %761 = vmatprep.subr.bf16.mxu0 0
  %762 = vmatpush1.bf16.msra.mxu0 0
  %763 = vmatprep.subr.bf16.mxu0 0
  %764 = vmatpush1.bf16.msra.mxu0 0
  %765 = vmatprep.subr.bf16.mxu0 0
  %766 = vmatpush1.bf16.msra.mxu0 0
  %767 = vmatprep.mubr.bf16.mxu0 0
  %768 = vmatmul.mubr.bf16.gmra.mrb[0].mxu0 %v671
  %v769 = vpop.f32.mrb[0].mxu0
  %v770 = vadd.f32 %v656, %v769
  %v771 = vpop.f32.mrb[0].mxu0
  %v772 = vpop.f32.mrb[0].mxu0
  %v773 = vadd.f32 %v656, %v772
  %v774 = vpop.f32.mrb[0].mxu0
  %775 = vdwg.mxu0
  %v776 = vmul.f32 %v770, 0.2
  %v777 = vmul.f32 %v773, 0.2
  %v778 = vmax.f32 %v770, %v776
  %v779 = vmax.f32 %v773, %v777
  %780 = vst [vmem:[%s13] ss:$2 sm:$0xff] %v716
  %s781 = scalar_lea.vmem %s13, 16
  %782 = vst [vmem:[%s781] ss:$2 sm:$0xff] %v717
  %s783 = scalar_lea.vmem %s13, 1
  %784 = vst [vmem:[%s783] ss:$2 sm:$0xff] %v778
  %s785 = scalar_lea.vmem %s13, 17
  %786 = vst [vmem:[%s785] ss:$2 sm:$0xff] %v779
  %v787 = vld [vmem:[%s13] sm:$0xff]
  %v788 = vld [vmem:[%s13 + $0x8] sm:$0xff]
  %v789 = vld [vmem:[%s13 + $0x10] sm:$0xff]
  %v790 = vld [vmem:[%s13 + $0x18] sm:$0xff]
  %v791 = vpack.c.bf16 %v788, %v787
  %v792 = vpack.c.bf16 %v790, %v789
  %v794 = vshrl.u32 %v792, 16
  %v796 = vrot.slane %v794, 7
  %v799 = vshrl.u32 %v791, 16
  %v801 = vrot.slane %v799, 7
  %v802 = vshll.u32 %v791, 16
  %v804 = vor.u32 %v801, %v802
  %v805 = vshll.u32 %v792, 16
  %v807 = vor.u32 %v796, %v805
  %v808 = vsel %vm203, %v801, %v807
  %v811 = vsel %vm204, %v796, %v804
  %v812 = vmul.bf16 %v811, %v152
  %v813 = vmul.bf16 %v808, %v153
  %v814 = vld [vmem:[%s7] sm:$0xf]
  %v815 = vld [vmem:[%s7 + $0x4] sm:$0xf]
  %v816 = vld [vmem:[%s7 + $0x8] sm:$0xf]
  %v817 = vld [vmem:[%s7 + $0xc] sm:$0xf]
  %v818 = vld [vmem:[%s7 + $0x10] sm:$0xf]
  %v819 = vld [vmem:[%s7 + $0x14] sm:$0xf]
  %s820 = scalar_lea.vmem %s7, 24
  %v821 = vld [vmem:[%s820] sm:$0xf]
  %v822 = vld [vmem:[%s820 + $0x4] sm:$0xf]
  %v823 = vld [vmem:[%s820 + $0x8] sm:$0xf]
  %v824 = vld [vmem:[%s820 + $0xc] sm:$0xf]
  %v825 = vld [vmem:[%s820 + $0x10] sm:$0xf]
  %v826 = vld [vmem:[%s820 + $0x14] sm:$0xf]
  %v833 = vunpack.c.l.b16 %v821
  %v834 = vunpack.c.l.b16 %v822
  %v835 = vunpack.c.l.b16 %v823
  %v836 = vunpack.c.l.b16 %v824
  %v837 = vunpack.c.l.b16 %v825
  %v838 = vunpack.c.l.b16 %v826
  %v839 = vpack.c.b16 %v834, %v833
  %v840 = vpack.c.b16 %v836, %v835
  %v841 = vpack.c.b16 %v838, %v837
  %v845 = vsel %vm238, %v791, 0
  %v847 = vsel %vm238, %v792, 0
  %849 = vmatprep.subr.bf16.mxu0 0
  %850 = vmatpush1.bf16.msra.mxu0 %v839
  %851 = vmatprep.subr.bf16.mxu0 0
  %852 = vmatpush1.bf16.msra.mxu0 %v840
  %853 = vmatprep.subr.bf16.mxu0 0
  %854 = vmatpush1.bf16.msra.mxu0 %v841
  %855 = vmatprep.subr.bf16.mxu0 0
  %856 = vmatpush1.bf16.msra.mxu0 0
  %857 = vmatprep.subr.bf16.mxu0 0
  %858 = vmatpush1.bf16.msra.mxu0 0
  %859 = vmatprep.subr.bf16.mxu0 0
  %860 = vmatpush1.bf16.msra.mxu0 0
  %861 = vmatprep.subr.bf16.mxu0 0
  %862 = vmatpush1.bf16.msra.mxu0 0
  %863 = vmatprep.subr.bf16.mxu0 0
  %864 = vmatpush1.bf16.msra.mxu0 0
  %865 = vmatprep.subr.bf16.mxu0 0
  %866 = vmatpush1.bf16.msra.mxu0 0
  %867 = vmatprep.subr.bf16.mxu0 0
  %868 = vmatpush1.bf16.msra.mxu0 0
  %869 = vmatprep.subr.bf16.mxu0 0
  %870 = vmatpush1.bf16.msra.mxu0 0
  %871 = vmatprep.subr.bf16.mxu0 0
  %872 = vmatpush1.bf16.msra.mxu0 0
  %873 = vmatprep.subr.bf16.mxu0 0
  %874 = vmatpush1.bf16.msra.mxu0 0
  %875 = vmatprep.subr.bf16.mxu0 0
  %876 = vmatpush1.bf16.msra.mxu0 0
  %877 = vmatprep.subr.bf16.mxu0 0
  %878 = vmatpush1.bf16.msra.mxu0 0
  %879 = vmatprep.subr.bf16.mxu0 0
  %880 = vmatpush1.bf16.msra.mxu0 0
  %881 = vmatprep.mubr.bf16.mxu0 0
  %882 = vmatmul.mubr.bf16.gmra.mrb[0].mxu0 %v845
  %v883 = vpop.f32.mrb[0].mxu0
  %v884 = vadd.f32 0.0, %v883
  %v885 = vpop.f32.mrb[0].mxu0
  %v886 = vpop.f32.mrb[0].mxu0
  %v887 = vadd.f32 0.0, %v886
  %v888 = vpop.f32.mrb[0].mxu0
  %889 = vmatprep.mubr.bf16.mxu0 0
  %890 = vmatmul.mubr.bf16.gmra.mrb[0].mxu0 %v847
  %v891 = vpop.f32.mrb[0].mxu0
  %v892 = vadd.f32 0.0, %v891
  %v893 = vpop.f32.mrb[0].mxu0
  %v894 = vpop.f32.mrb[0].mxu0
  %v895 = vadd.f32 0.0, %v894
  %v896 = vpop.f32.mrb[0].mxu0
  %897 = vdwg.mxu0
  %v904 = vunpack.c.l.b16 %v814
  %v905 = vunpack.c.l.b16 %v815
  %v906 = vunpack.c.l.b16 %v816
  %v907 = vunpack.c.l.b16 %v817
  %v908 = vunpack.c.l.b16 %v818
  %v909 = vunpack.c.l.b16 %v819
  %v910 = vpack.c.b16 %v905, %v904
  %v911 = vpack.c.b16 %v907, %v906
  %v912 = vpack.c.b16 %v909, %v908
  %v917 = vsel %vm238, %v812, 0
  %v920 = vsel %vm238, %v813, 0
  %922 = vmatprep.subr.bf16.mxu0 0
  %923 = vmatpush1.bf16.msra.mxu0 %v910
  %924 = vmatprep.subr.bf16.mxu0 0
  %925 = vmatpush1.bf16.msra.mxu0 %v911
  %926 = vmatprep.subr.bf16.mxu0 0
  %927 = vmatpush1.bf16.msra.mxu0 %v912
  %928 = vmatprep.subr.bf16.mxu0 0
  %929 = vmatpush1.bf16.msra.mxu0 0
  %930 = vmatprep.subr.bf16.mxu0 0
  %931 = vmatpush1.bf16.msra.mxu0 0
  %932 = vmatprep.subr.bf16.mxu0 0
  %933 = vmatpush1.bf16.msra.mxu0 0
  %934 = vmatprep.subr.bf16.mxu0 0
  %935 = vmatpush1.bf16.msra.mxu0 0
  %936 = vmatprep.subr.bf16.mxu0 0
  %937 = vmatpush1.bf16.msra.mxu0 0
  %938 = vmatprep.subr.bf16.mxu0 0
  %939 = vmatpush1.bf16.msra.mxu0 0
  %940 = vmatprep.subr.bf16.mxu0 0
  %941 = vmatpush1.bf16.msra.mxu0 0
  %942 = vmatprep.subr.bf16.mxu0 0
  %943 = vmatpush1.bf16.msra.mxu0 0
  %944 = vmatprep.subr.bf16.mxu0 0
  %945 = vmatpush1.bf16.msra.mxu0 0
  %946 = vmatprep.subr.bf16.mxu0 0
  %947 = vmatpush1.bf16.msra.mxu0 0
  %948 = vmatprep.subr.bf16.mxu0 0
  %949 = vmatpush1.bf16.msra.mxu0 0
  %950 = vmatprep.subr.bf16.mxu0 0
  %951 = vmatpush1.bf16.msra.mxu0 0
  %952 = vmatprep.subr.bf16.mxu0 0
  %953 = vmatpush1.bf16.msra.mxu0 0
  %954 = vmatprep.mubr.bf16.mxu0 0
  %955 = vmatmul.mubr.bf16.gmra.mrb[0].mxu0 %v917
  %v956 = vpop.f32.mrb[0].mxu0
  %v957 = vadd.f32 %v884, %v956
  %v958 = vpop.f32.mrb[0].mxu0
  %v959 = vpop.f32.mrb[0].mxu0
  %v960 = vadd.f32 %v887, %v959
  %v961 = vpop.f32.mrb[0].mxu0
  %962 = vmatprep.mubr.bf16.mxu0 0
  %963 = vmatmul.mubr.bf16.gmra.mrb[0].mxu0 %v920
  %v964 = vpop.f32.mrb[0].mxu0
  %v965 = vadd.f32 %v892, %v964
  %v966 = vpop.f32.mrb[0].mxu0
  %v967 = vpop.f32.mrb[0].mxu0
  %v968 = vadd.f32 %v895, %v967
  %v969 = vpop.f32.mrb[0].mxu0
  %970 = vdwg.mxu0
  %v971 = vrot.slane %v802, 1
  %v972 = vor.u32 %v799, %v971
  %v973 = vrot.slane %v805, 1
  %v974 = vsel %vm566, %v972, %v973
  %v975 = vor.u32 %v794, %v973
  %v979 = vsel %vm567, %v975, %v971
  %v980 = vmul.bf16 %v974, %v166
  %v981 = vmul.bf16 %v979, %v167
  %s982 = scalar_lea.vmem %s7, 48
  %v983 = vld [vmem:[%s982] sm:$0xf]
  %v984 = vld [vmem:[%s982 + $0x4] sm:$0xf]
  %v985 = vld [vmem:[%s982 + $0x8] sm:$0xf]
  %v986 = vld [vmem:[%s982 + $0xc] sm:$0xf]
  %v987 = vld [vmem:[%s982 + $0x10] sm:$0xf]
  %v988 = vld [vmem:[%s982 + $0x14] sm:$0xf]
  %v995 = vunpack.c.l.b16 %v983
  %v996 = vunpack.c.l.b16 %v984
  %v997 = vunpack.c.l.b16 %v985
  %v998 = vunpack.c.l.b16 %v986
  %v999 = vunpack.c.l.b16 %v987
  %v1000 = vunpack.c.l.b16 %v988
  %v1001 = vpack.c.b16 %v996, %v995
  %v1002 = vpack.c.b16 %v998, %v997
  %v1003 = vpack.c.b16 %v1000, %v999
  %v1008 = vsel %vm238, %v980, 0
  %v1011 = vsel %vm238, %v981, 0
  %1013 = vmatprep.subr.bf16.mxu0 0
  %1014 = vmatpush1.bf16.msra.mxu0 %v1001
  %1015 = vmatprep.subr.bf16.mxu0 0
  %1016 = vmatpush1.bf16.msra.mxu0 %v1002
  %1017 = vmatprep.subr.bf16.mxu0 0
  %1018 = vmatpush1.bf16.msra.mxu0 %v1003
  %1019 = vmatprep.subr.bf16.mxu0 0
  %1020 = vmatpush1.bf16.msra.mxu0 0
  %1021 = vmatprep.subr.bf16.mxu0 0
  %1022 = vmatpush1.bf16.msra.mxu0 0
  %1023 = vmatprep.subr.bf16.mxu0 0
  %1024 = vmatpush1.bf16.msra.mxu0 0
  %1025 = vmatprep.subr.bf16.mxu0 0
  %1026 = vmatpush1.bf16.msra.mxu0 0
  %1027 = vmatprep.subr.bf16.mxu0 0
  %1028 = vmatpush1.bf16.msra.mxu0 0
  %1029 = vmatprep.subr.bf16.mxu0 0
  %1030 = vmatpush1.bf16.msra.mxu0 0
  %1031 = vmatprep.subr.bf16.mxu0 0
  %1032 = vmatpush1.bf16.msra.mxu0 0
  %1033 = vmatprep.subr.bf16.mxu0 0
  %1034 = vmatpush1.bf16.msra.mxu0 0
  %1035 = vmatprep.subr.bf16.mxu0 0
  %1036 = vmatpush1.bf16.msra.mxu0 0
  %1037 = vmatprep.subr.bf16.mxu0 0
  %1038 = vmatpush1.bf16.msra.mxu0 0
  %1039 = vmatprep.subr.bf16.mxu0 0
  %1040 = vmatpush1.bf16.msra.mxu0 0
  %1041 = vmatprep.subr.bf16.mxu0 0
  %1042 = vmatpush1.bf16.msra.mxu0 0
  %1043 = vmatprep.subr.bf16.mxu0 0
  %1044 = vmatpush1.bf16.msra.mxu0 0
  %1045 = vmatprep.mubr.bf16.mxu0 0
  %1046 = vmatmul.mubr.bf16.gmra.mrb[0].mxu0 %v1008
  %v1047 = vpop.f32.mrb[0].mxu0
  %v1048 = vadd.f32 0.0, %v1047
  %v1049 = vpop.f32.mrb[0].mxu0
  %v1050 = vpop.f32.mrb[0].mxu0
  %v1051 = vadd.f32 0.0, %v1050
  %v1052 = vpop.f32.mrb[0].mxu0
  %1053 = vmatprep.mubr.bf16.mxu0 0
  %1054 = vmatmul.mubr.bf16.gmra.mrb[0].mxu0 %v1011
  %v1055 = vpop.f32.mrb[0].mxu0
  %v1056 = vadd.f32 0.0, %v1055
  %v1057 = vpop.f32.mrb[0].mxu0
  %v1058 = vpop.f32.mrb[0].mxu0
  %v1059 = vadd.f32 0.0, %v1058
  %v1060 = vpop.f32.mrb[0].mxu0
  %1061 = vdwg.mxu0
  %v1062 = vadd.f32 %v957, %v1048
  %v1063 = vadd.f32 %v960, %v1051
  %v1064 = vadd.f32 %v965, %v1056
  %v1065 = vadd.f32 %v968, %v1059
  %v1066 = vld [vmem:[%s8] sm:$0x1]
  %v1068 = vlaneseq
  %v1069 = vshrl.u32 %v1068, 7
  %v1070 = vsub.s32 0, %v1069
  %v1071 = vrot.slane %v1066, %v1070
  %v1073 = vadd.f32 %v1062, %v1071
  %v1074 = vadd.f32 %v1063, %v1071
  %v1075 = vadd.f32 %v1064, %v1071
  %v1076 = vadd.f32 %v1065, %v1071
  %v1077 = vmul.f32 %v1073, 0.2
  %v1078 = vmul.f32 %v1074, 0.2
  %v1079 = vmul.f32 %v1075, 0.2
  %v1080 = vmul.f32 %v1076, 0.2
  %v1081 = vmax.f32 %v1073, %v1077
  %v1082 = vmax.f32 %v1074, %v1078
  %v1083 = vmax.f32 %v1075, %v1079
  %v1084 = vmax.f32 %v1076, %v1080
  %vm1085 = vcmask 523264
  %1086 = vst.msk [vmem:[%s14] sm:$0xff] %vm1085, %v1081
  %1087 = vst.msk [vmem:[%s14 + $0x8] sm:$0xff] %vm1085, %v1082
  %1088 = vst.msk [vmem:[%s14 + $0x10] sm:$0xff] %vm1085, %v1083
  %1089 = vst.msk [vmem:[%s14 + $0x18] sm:$0xff] %vm1085, %v1084
  %v1090 = vld [vmem:[%s14] ss:$2 sm:$0xff]
  %s1091 = scalar_lea.vmem %s14, 16
  %v1092 = vld [vmem:[%s1091] ss:$2 sm:$0xff]
  %v1093 = vpack.c.bf16 %v1092, %v1090
  %s1094 = scalar_lea.vmem %s14, 1
  %v1095 = vld [vmem:[%s1094] ss:$2 sm:$0xff]
  %s1096 = scalar_lea.vmem %s14, 17
  %v1097 = vld [vmem:[%s1096] ss:$2 sm:$0xff]
  %v1098 = vpack.c.bf16 %v1097, %v1095
  %v1100 = vshrl.u32 %v1098, 16
  %v1102 = vrot.slane %v1100, 7
  %v1104 = vshll.u32 %v1098, 16
  %v1106 = vor.u32 %v1102, %v1104
  %v1108 = vsel %vm204, %v1102, %v1106
  %v1109 = vmul.bf16 %v1108, %v82
  %v1110 = vld [vmem:[%s9] sm:$0xf]
  %v1111 = vld [vmem:[%s9 + $0x4] sm:$0xf]
  %v1112 = vld [vmem:[%s9 + $0x8] sm:$0xf]
  %v1113 = vld [vmem:[%s9 + $0xc] sm:$0xf]
  %v1114 = vld [vmem:[%s9 + $0x10] sm:$0xf]
  %v1115 = vld [vmem:[%s9 + $0x14] sm:$0xf]
  %v1116 = vld [vmem:[%s9 + $0x18] sm:$0xf]
  %v1117 = vld [vmem:[%s9 + $0x1c] sm:$0xf]
  %s1118 = scalar_lea.vmem %s9, 32
  %v1119 = vld [vmem:[%s1118] sm:$0xf]
  %v1120 = vld [vmem:[%s1118 + $0x4] sm:$0xf]
  %v1121 = vld [vmem:[%s1118 + $0x8] sm:$0xf]
  %v1122 = vld [vmem:[%s1118 + $0xc] sm:$0xf]
  %v1123 = vld [vmem:[%s1118 + $0x10] sm:$0xf]
  %v1124 = vld [vmem:[%s1118 + $0x14] sm:$0xf]
  %v1125 = vld [vmem:[%s1118 + $0x18] sm:$0xf]
  %v1126 = vld [vmem:[%s1118 + $0x1c] sm:$0xf]
  %v1135 = vunpack.c.l.b16 %v1119
  %v1136 = vunpack.c.l.b16 %v1120
  %v1137 = vunpack.c.l.b16 %v1121
  %v1138 = vunpack.c.l.b16 %v1122
  %v1139 = vunpack.c.l.b16 %v1123
  %v1140 = vunpack.c.l.b16 %v1124
  %v1141 = vunpack.c.l.b16 %v1125
  %v1142 = vunpack.c.l.b16 %v1126
  %v1143 = vpack.c.b16 %v1136, %v1135
  %v1144 = vpack.c.b16 %v1138, %v1137
  %v1145 = vpack.c.b16 %v1140, %v1139
  %v1146 = vpack.c.b16 %v1142, %v1141
  %v1152 = vsel %vm1085, %v1093, 0
  %1154 = vmatprep.subr.bf16.mxu0 0
  %1155 = vmatpush1.bf16.msra.mxu0 %v1143
  %1156 = vmatprep.subr.bf16.mxu0 0
  %1157 = vmatpush1.bf16.msra.mxu0 %v1144
  %1158 = vmatprep.subr.bf16.mxu0 0
  %1159 = vmatpush1.bf16.msra.mxu0 %v1145
  %1160 = vmatprep.subr.bf16.mxu0 0
  %1161 = vmatpush1.bf16.msra.mxu0 %v1146
  %1162 = vmatprep.subr.bf16.mxu0 0
  %1163 = vmatpush1.bf16.msra.mxu0 0
  %1164 = vmatprep.subr.bf16.mxu0 0
  %1165 = vmatpush1.bf16.msra.mxu0 0
  %1166 = vmatprep.subr.bf16.mxu0 0
  %1167 = vmatpush1.bf16.msra.mxu0 0
  %1168 = vmatprep.subr.bf16.mxu0 0
  %1169 = vmatpush1.bf16.msra.mxu0 0
  %1170 = vmatprep.subr.bf16.mxu0 0
  %1171 = vmatpush1.bf16.msra.mxu0 0
  %1172 = vmatprep.subr.bf16.mxu0 0
  %1173 = vmatpush1.bf16.msra.mxu0 0
  %1174 = vmatprep.subr.bf16.mxu0 0
  %1175 = vmatpush1.bf16.msra.mxu0 0
  %1176 = vmatprep.subr.bf16.mxu0 0
  %1177 = vmatpush1.bf16.msra.mxu0 0
  %1178 = vmatprep.subr.bf16.mxu0 0
  %1179 = vmatpush1.bf16.msra.mxu0 0
  %1180 = vmatprep.subr.bf16.mxu0 0
  %1181 = vmatpush1.bf16.msra.mxu0 0
  %1182 = vmatprep.subr.bf16.mxu0 0
  %1183 = vmatpush1.bf16.msra.mxu0 0
  %1184 = vmatprep.subr.bf16.mxu0 0
  %1185 = vmatpush1.bf16.msra.mxu0 0
  %1186 = vmatprep.mubr.bf16.mxu0 0
  %1187 = vmatmul.mubr.bf16.gmra.mrb[0].mxu0 %v1152
  %v1188 = vpop.f32.mrb[0].mxu0
  %v1189 = vadd.f32 0.0, %v1188
  %v1190 = vpop.f32.mrb[0].mxu0
  %v1191 = vpop.f32.mrb[0].mxu0
  %v1192 = vadd.f32 0.0, %v1191
  %v1193 = vpop.f32.mrb[0].mxu0
  %1194 = vdwg.mxu0
  %v1203 = vunpack.c.l.b16 %v1110
  %v1204 = vunpack.c.l.b16 %v1111
  %v1205 = vunpack.c.l.b16 %v1112
  %v1206 = vunpack.c.l.b16 %v1113
  %v1207 = vunpack.c.l.b16 %v1114
  %v1208 = vunpack.c.l.b16 %v1115
  %v1209 = vunpack.c.l.b16 %v1116
  %v1210 = vunpack.c.l.b16 %v1117
  %v1211 = vpack.c.b16 %v1204, %v1203
  %v1212 = vpack.c.b16 %v1206, %v1205
  %v1213 = vpack.c.b16 %v1208, %v1207
  %v1214 = vpack.c.b16 %v1210, %v1209
  %v1220 = vsel %vm1085, %v1109, 0
  %1222 = vmatprep.subr.bf16.mxu0 0
  %1223 = vmatpush1.bf16.msra.mxu0 %v1211
  %1224 = vmatprep.subr.bf16.mxu0 0
  %1225 = vmatpush1.bf16.msra.mxu0 %v1212
  %1226 = vmatprep.subr.bf16.mxu0 0
  %1227 = vmatpush1.bf16.msra.mxu0 %v1213
  %1228 = vmatprep.subr.bf16.mxu0 0
  %1229 = vmatpush1.bf16.msra.mxu0 %v1214
  %1230 = vmatprep.subr.bf16.mxu0 0
  %1231 = vmatpush1.bf16.msra.mxu0 0
  %1232 = vmatprep.subr.bf16.mxu0 0
  %1233 = vmatpush1.bf16.msra.mxu0 0
  %1234 = vmatprep.subr.bf16.mxu0 0
  %1235 = vmatpush1.bf16.msra.mxu0 0
  %1236 = vmatprep.subr.bf16.mxu0 0
  %1237 = vmatpush1.bf16.msra.mxu0 0
  %1238 = vmatprep.subr.bf16.mxu0 0
  %1239 = vmatpush1.bf16.msra.mxu0 0
  %1240 = vmatprep.subr.bf16.mxu0 0
  %1241 = vmatpush1.bf16.msra.mxu0 0
  %1242 = vmatprep.subr.bf16.mxu0 0
  %1243 = vmatpush1.bf16.msra.mxu0 0
  %1244 = vmatprep.subr.bf16.mxu0 0
  %1245 = vmatpush1.bf16.msra.mxu0 0
  %1246 = vmatprep.subr.bf16.mxu0 0
  %1247 = vmatpush1.bf16.msra.mxu0 0
  %1248 = vmatprep.subr.bf16.mxu0 0
  %1249 = vmatpush1.bf16.msra.mxu0 0
  %1250 = vmatprep.subr.bf16.mxu0 0
  %1251 = vmatpush1.bf16.msra.mxu0 0
  %1252 = vmatprep.subr.bf16.mxu0 0
  %1253 = vmatpush1.bf16.msra.mxu0 0
  %1254 = vmatprep.mubr.bf16.mxu0 0
  %1255 = vmatmul.mubr.bf16.gmra.mrb[0].mxu0 %v1220
  %v1256 = vpop.f32.mrb[0].mxu0
  %v1257 = vadd.f32 %v1189, %v1256
  %v1258 = vpop.f32.mrb[0].mxu0
  %v1259 = vpop.f32.mrb[0].mxu0
  %v1260 = vadd.f32 %v1192, %v1259
  %v1261 = vpop.f32.mrb[0].mxu0
  %1262 = vdwg.mxu0
  %s1263 = scalar_lea.vmem %s9, 64
  %v1264 = vld [vmem:[%s1263] sm:$0xf]
  %v1265 = vld [vmem:[%s1263 + $0x4] sm:$0xf]
  %v1266 = vld [vmem:[%s1263 + $0x8] sm:$0xf]
  %v1267 = vld [vmem:[%s1263 + $0xc] sm:$0xf]
  %v1268 = vld [vmem:[%s1263 + $0x10] sm:$0xf]
  %v1269 = vld [vmem:[%s1263 + $0x14] sm:$0xf]
  %v1270 = vld [vmem:[%s1263 + $0x18] sm:$0xf]
  %v1271 = vld [vmem:[%s1263 + $0x1c] sm:$0xf]
  %v1280 = vunpack.c.l.b16 %v1264
  %v1281 = vunpack.c.l.b16 %v1265
  %v1282 = vunpack.c.l.b16 %v1266
  %v1283 = vunpack.c.l.b16 %v1267
  %v1284 = vunpack.c.l.b16 %v1268
  %v1285 = vunpack.c.l.b16 %v1269
  %v1286 = vunpack.c.l.b16 %v1270
  %v1287 = vunpack.c.l.b16 %v1271
  %v1288 = vpack.c.b16 %v1281, %v1280
  %v1289 = vpack.c.b16 %v1283, %v1282
  %v1290 = vpack.c.b16 %v1285, %v1284
  %v1291 = vpack.c.b16 %v1287, %v1286
  %v1296 = vsel %vm1085, %v1098, 0
  %1298 = vmatprep.subr.bf16.mxu0 0
  %1299 = vmatpush1.bf16.msra.mxu0 %v1288
  %1300 = vmatprep.subr.bf16.mxu0 0
  %1301 = vmatpush1.bf16.msra.mxu0 %v1289
  %1302 = vmatprep.subr.bf16.mxu0 0
  %1303 = vmatpush1.bf16.msra.mxu0 %v1290
  %1304 = vmatprep.subr.bf16.mxu0 0
  %1305 = vmatpush1.bf16.msra.mxu0 %v1291
  %1306 = vmatprep.subr.bf16.mxu0 0
  %1307 = vmatpush1.bf16.msra.mxu0 0
  %1308 = vmatprep.subr.bf16.mxu0 0
  %1309 = vmatpush1.bf16.msra.mxu0 0
  %1310 = vmatprep.subr.bf16.mxu0 0
  %1311 = vmatpush1.bf16.msra.mxu0 0
  %1312 = vmatprep.subr.bf16.mxu0 0
  %1313 = vmatpush1.bf16.msra.mxu0 0
  %1314 = vmatprep.subr.bf16.mxu0 0
  %1315 = vmatpush1.bf16.msra.mxu0 0
  %1316 = vmatprep.subr.bf16.mxu0 0
  %1317 = vmatpush1.bf16.msra.mxu0 0
  %1318 = vmatprep.subr.bf16.mxu0 0
  %1319 = vmatpush1.bf16.msra.mxu0 0
  %1320 = vmatprep.subr.bf16.mxu0 0
  %1321 = vmatpush1.bf16.msra.mxu0 0
  %1322 = vmatprep.subr.bf16.mxu0 0
  %1323 = vmatpush1.bf16.msra.mxu0 0
  %1324 = vmatprep.subr.bf16.mxu0 0
  %1325 = vmatpush1.bf16.msra.mxu0 0
  %1326 = vmatprep.subr.bf16.mxu0 0
  %1327 = vmatpush1.bf16.msra.mxu0 0
  %1328 = vmatprep.subr.bf16.mxu0 0
  %1329 = vmatpush1.bf16.msra.mxu0 0
  %1330 = vmatprep.mubr.bf16.mxu0 0
  %1331 = vmatmul.mubr.bf16.gmra.mrb[0].mxu0 %v1296
  %v1332 = vpop.f32.mrb[0].mxu0
  %v1333 = vadd.f32 0.0, %v1332
  %v1334 = vpop.f32.mrb[0].mxu0
  %v1335 = vpop.f32.mrb[0].mxu0
  %v1336 = vadd.f32 0.0, %v1335
  %v1337 = vpop.f32.mrb[0].mxu0
  %1338 = vdwg.mxu0
  %v1339 = vadd.f32 %v1257, %v1333
  %v1340 = vadd.f32 %v1260, %v1336
  %v1341 = vld [vmem:[%s10] sm:$0x1]
  %v1343 = vlaneseq
  %v1344 = vshrl.u32 %v1343, 7
  %v1345 = vsub.s32 0, %v1344
  %v1346 = vrot.slane %v1341, %v1345
  %v1348 = vadd.f32 %v1339, %v1346
  %v1349 = vadd.f32 %v1340, %v1346
  %v1350 = vmul.f32 %v1348, 0.2
  %v1351 = vmul.f32 %v1349, 0.2
  %v1352 = vmax.f32 %v1348, %v1350
  %v1353 = vmax.f32 %v1349, %v1351
  %1354 = vst.msk [vmem:[%s15] sm:$0xff] %vm1085, %v1352
  %1355 = vst.msk [vmem:[%s15 + $0x8] sm:$0xff] %vm1085, %v1353
  %v1356 = vld [vmem:[%s15] ss:$2 sm:$0xff]
  %v1357 = vpack.c.bf16 %v1356, %v1356
  %s1358 = scalar_lea.vmem %s15, 1
  %v1359 = vld [vmem:[%s1358] ss:$2 sm:$0xff]
  %v1360 = vpack.c.bf16 %v1359, %v1359
  %v1362 = vshrl.u32 %v1360, 16
  %v1364 = vrot.slane %v1362, 3
  %v1366 = vrot.slane %v1362, 7
  %v1367 = vshll.u32 %v1360, 16
  %v1369 = vor.u32 %v1366, %v1367
  %v1371 = vsel %vm204, %v1364, %v1369
  %v1372 = vmul.bf16 %v1371, %v183
  %v1373 = vld [vmem:[%s11] sm:$0xf]
  %v1374 = vld [vmem:[%s11 + $0x4] sm:$0xf]
  %v1375 = vld [vmem:[%s11 + $0x8] sm:$0xf]
  %v1376 = vld [vmem:[%s11 + $0xc] sm:$0xf]
  %v1377 = vld [vmem:[%s11 + $0x10] sm:$0xf]
  %v1378 = vld [vmem:[%s11 + $0x14] sm:$0xf]
  %v1379 = vld [vmem:[%s11 + $0x18] sm:$0xf]
  %v1380 = vld [vmem:[%s11 + $0x1c] sm:$0xf]
  %s1381 = scalar_lea.vmem %s11, 32
  %v1382 = vld [vmem:[%s1381] sm:$0xf]
  %v1383 = vld [vmem:[%s1381 + $0x4] sm:$0xf]
  %v1384 = vld [vmem:[%s1381 + $0x8] sm:$0xf]
  %v1385 = vld [vmem:[%s1381 + $0xc] sm:$0xf]
  %v1386 = vld [vmem:[%s1381 + $0x10] sm:$0xf]
  %v1387 = vld [vmem:[%s1381 + $0x14] sm:$0xf]
  %v1388 = vld [vmem:[%s1381 + $0x18] sm:$0xf]
  %v1389 = vld [vmem:[%s1381 + $0x1c] sm:$0xf]
  %v1398 = vunpack.c.l.b16 %v1382
  %v1399 = vunpack.c.l.b16 %v1383
  %v1400 = vunpack.c.l.b16 %v1384
  %v1401 = vunpack.c.l.b16 %v1385
  %v1402 = vunpack.c.l.b16 %v1386
  %v1403 = vunpack.c.l.b16 %v1387
  %v1404 = vunpack.c.l.b16 %v1388
  %v1405 = vunpack.c.l.b16 %v1389
  %v1406 = vpack.c.b16 %v1399, %v1398
  %v1407 = vpack.c.b16 %v1401, %v1400
  %v1408 = vpack.c.b16 %v1403, %v1402
  %v1409 = vpack.c.b16 %v1405, %v1404
  %v1415 = vsel %vm1085, %v1357, 0
  %1417 = vmatprep.subr.bf16.mxu0 0
  %1418 = vmatpush1.bf16.msra.mxu0 %v1406
  %1419 = vmatprep.subr.bf16.mxu0 0
  %1420 = vmatpush1.bf16.msra.mxu0 %v1407
  %1421 = vmatprep.subr.bf16.mxu0 0
  %1422 = vmatpush1.bf16.msra.mxu0 %v1408
  %1423 = vmatprep.subr.bf16.mxu0 0
  %1424 = vmatpush1.bf16.msra.mxu0 %v1409
  %1425 = vmatprep.subr.bf16.mxu0 0
  %1426 = vmatpush1.bf16.msra.mxu0 0
  %1427 = vmatprep.subr.bf16.mxu0 0
  %1428 = vmatpush1.bf16.msra.mxu0 0
  %1429 = vmatprep.subr.bf16.mxu0 0
  %1430 = vmatpush1.bf16.msra.mxu0 0
  %1431 = vmatprep.subr.bf16.mxu0 0
  %1432 = vmatpush1.bf16.msra.mxu0 0
  %1433 = vmatprep.subr.bf16.mxu0 0
  %1434 = vmatpush1.bf16.msra.mxu0 0
  %1435 = vmatprep.subr.bf16.mxu0 0
  %1436 = vmatpush1.bf16.msra.mxu0 0
  %1437 = vmatprep.subr.bf16.mxu0 0
  %1438 = vmatpush1.bf16.msra.mxu0 0
  %1439 = vmatprep.subr.bf16.mxu0 0
  %1440 = vmatpush1.bf16.msra.mxu0 0
  %1441 = vmatprep.subr.bf16.mxu0 0
  %1442 = vmatpush1.bf16.msra.mxu0 0
  %1443 = vmatprep.subr.bf16.mxu0 0
  %1444 = vmatpush1.bf16.msra.mxu0 0
  %1445 = vmatprep.subr.bf16.mxu0 0
  %1446 = vmatpush1.bf16.msra.mxu0 0
  %1447 = vmatprep.subr.bf16.mxu0 0
  %1448 = vmatpush1.bf16.msra.mxu0 0
  %1449 = vmatprep.mubr.bf16.mxu0 0
  %1450 = vmatmul.mubr.bf16.gmra.mrb[0].mxu0 %v1415
  %v1451 = vpop.f32.mrb[0].mxu0
  %v1452 = vadd.f32 0.0, %v1451
  %v1453 = vpop.f32.mrb[0].mxu0
  %v1454 = vpop.f32.mrb[0].mxu0
  %v1455 = vpop.f32.mrb[0].mxu0
  %1456 = vdwg.mxu0
  %v1465 = vunpack.c.l.b16 %v1373
  %v1466 = vunpack.c.l.b16 %v1374
  %v1467 = vunpack.c.l.b16 %v1375
  %v1468 = vunpack.c.l.b16 %v1376
  %v1469 = vunpack.c.l.b16 %v1377
  %v1470 = vunpack.c.l.b16 %v1378
  %v1471 = vunpack.c.l.b16 %v1379
  %v1472 = vunpack.c.l.b16 %v1380
  %v1473 = vpack.c.b16 %v1466, %v1465
  %v1474 = vpack.c.b16 %v1468, %v1467
  %v1475 = vpack.c.b16 %v1470, %v1469
  %v1476 = vpack.c.b16 %v1472, %v1471
  %v1482 = vsel %vm1085, %v1372, 0
  %1484 = vmatprep.subr.bf16.mxu0 0
  %1485 = vmatpush1.bf16.msra.mxu0 %v1473
  %1486 = vmatprep.subr.bf16.mxu0 0
  %1487 = vmatpush1.bf16.msra.mxu0 %v1474
  %1488 = vmatprep.subr.bf16.mxu0 0
  %1489 = vmatpush1.bf16.msra.mxu0 %v1475
  %1490 = vmatprep.subr.bf16.mxu0 0
  %1491 = vmatpush1.bf16.msra.mxu0 %v1476
  %1492 = vmatprep.subr.bf16.mxu0 0
  %1493 = vmatpush1.bf16.msra.mxu0 0
  %1494 = vmatprep.subr.bf16.mxu0 0
  %1495 = vmatpush1.bf16.msra.mxu0 0
  %1496 = vmatprep.subr.bf16.mxu0 0
  %1497 = vmatpush1.bf16.msra.mxu0 0
  %1498 = vmatprep.subr.bf16.mxu0 0
  %1499 = vmatpush1.bf16.msra.mxu0 0
  %1500 = vmatprep.subr.bf16.mxu0 0
  %1501 = vmatpush1.bf16.msra.mxu0 0
  %1502 = vmatprep.subr.bf16.mxu0 0
  %1503 = vmatpush1.bf16.msra.mxu0 0
  %1504 = vmatprep.subr.bf16.mxu0 0
  %1505 = vmatpush1.bf16.msra.mxu0 0
  %1506 = vmatprep.subr.bf16.mxu0 0
  %1507 = vmatpush1.bf16.msra.mxu0 0
  %1508 = vmatprep.subr.bf16.mxu0 0
  %1509 = vmatpush1.bf16.msra.mxu0 0
  %1510 = vmatprep.subr.bf16.mxu0 0
  %1511 = vmatpush1.bf16.msra.mxu0 0
  %1512 = vmatprep.subr.bf16.mxu0 0
  %1513 = vmatpush1.bf16.msra.mxu0 0
  %1514 = vmatprep.subr.bf16.mxu0 0
  %1515 = vmatpush1.bf16.msra.mxu0 0
  %1516 = vmatprep.mubr.bf16.mxu0 0
  %1517 = vmatmul.mubr.bf16.gmra.mrb[0].mxu0 %v1482
  %v1518 = vpop.f32.mrb[0].mxu0
  %v1519 = vadd.f32 %v1452, %v1518
  %v1520 = vpop.f32.mrb[0].mxu0
  %v1521 = vpop.f32.mrb[0].mxu0
  %v1522 = vpop.f32.mrb[0].mxu0
  %1523 = vdwg.mxu0
  %s1524 = scalar_lea.vmem %s11, 64
  %v1525 = vld [vmem:[%s1524] sm:$0xf]
  %v1526 = vld [vmem:[%s1524 + $0x4] sm:$0xf]
  %v1527 = vld [vmem:[%s1524 + $0x8] sm:$0xf]
  %v1528 = vld [vmem:[%s1524 + $0xc] sm:$0xf]
  %v1529 = vld [vmem:[%s1524 + $0x10] sm:$0xf]
  %v1530 = vld [vmem:[%s1524 + $0x14] sm:$0xf]
  %v1531 = vld [vmem:[%s1524 + $0x18] sm:$0xf]
  %v1532 = vld [vmem:[%s1524 + $0x1c] sm:$0xf]
  %v1541 = vunpack.c.l.b16 %v1525
  %v1542 = vunpack.c.l.b16 %v1526
  %v1543 = vunpack.c.l.b16 %v1527
  %v1544 = vunpack.c.l.b16 %v1528
  %v1545 = vunpack.c.l.b16 %v1529
  %v1546 = vunpack.c.l.b16 %v1530
  %v1547 = vunpack.c.l.b16 %v1531
  %v1548 = vunpack.c.l.b16 %v1532
  %v1549 = vpack.c.b16 %v1542, %v1541
  %v1550 = vpack.c.b16 %v1544, %v1543
  %v1551 = vpack.c.b16 %v1546, %v1545
  %v1552 = vpack.c.b16 %v1548, %v1547
  %v1557 = vsel %vm1085, %v1360, 0
  %1559 = vmatprep.subr.bf16.mxu0 0
  %1560 = vmatpush1.bf16.msra.mxu0 %v1549
  %1561 = vmatprep.subr.bf16.mxu0 0
  %1562 = vmatpush1.bf16.msra.mxu0 %v1550
  %1563 = vmatprep.subr.bf16.mxu0 0
  %1564 = vmatpush1.bf16.msra.mxu0 %v1551
  %1565 = vmatprep.subr.bf16.mxu0 0
  %1566 = vmatpush1.bf16.msra.mxu0 %v1552
  %1567 = vmatprep.subr.bf16.mxu0 0
  %1568 = vmatpush1.bf16.msra.mxu0 0
  %1569 = vmatprep.subr.bf16.mxu0 0
  %1570 = vmatpush1.bf16.msra.mxu0 0
  %1571 = vmatprep.subr.bf16.mxu0 0
  %1572 = vmatpush1.bf16.msra.mxu0 0
  %1573 = vmatprep.subr.bf16.mxu0 0
  %1574 = vmatpush1.bf16.msra.mxu0 0
  %1575 = vmatprep.subr.bf16.mxu0 0
  %1576 = vmatpush1.bf16.msra.mxu0 0
  %1577 = vmatprep.subr.bf16.mxu0 0
  %1578 = vmatpush1.bf16.msra.mxu0 0
  %1579 = vmatprep.subr.bf16.mxu0 0
  %1580 = vmatpush1.bf16.msra.mxu0 0
  %1581 = vmatprep.subr.bf16.mxu0 0
  %1582 = vmatpush1.bf16.msra.mxu0 0
  %1583 = vmatprep.subr.bf16.mxu0 0
  %1584 = vmatpush1.bf16.msra.mxu0 0
  %1585 = vmatprep.subr.bf16.mxu0 0
  %1586 = vmatpush1.bf16.msra.mxu0 0
  %1587 = vmatprep.subr.bf16.mxu0 0
  %1588 = vmatpush1.bf16.msra.mxu0 0
  %1589 = vmatprep.subr.bf16.mxu0 0
  %1590 = vmatpush1.bf16.msra.mxu0 0
  %1591 = vmatprep.mubr.bf16.mxu0 0
  %1592 = vmatmul.mubr.bf16.gmra.mrb[0].mxu0 %v1557
  %v1593 = vpop.f32.mrb[0].mxu0
  %v1594 = vadd.f32 0.0, %v1593
  %v1595 = vpop.f32.mrb[0].mxu0
  %v1596 = vpop.f32.mrb[0].mxu0
  %v1597 = vpop.f32.mrb[0].mxu0
  %1598 = vdwg.mxu0
  %v1599 = vadd.f32 %v1519, %v1594
  %v1600 = vld [vmem:[%s12] sm:$0x1]
  %v1602 = vlaneseq
  %v1603 = vshrl.u32 %v1602, 7
  %v1604 = vsub.s32 0, %v1603
  %v1605 = vrot.slane %v1600, %v1604
  %v1607 = vadd.f32 %v1599, %v1605
  %v1608 = vmul.f32 %v1607, 0.2
  %v1609 = vmax.f32 %v1607, %v1608
  %1610 = vst.msk [vmem:[%s16] sm:$0xff] %vm1085, %v1609
  // Predicated region
  $region54: #{illu_generator_forward.1} parent=0 // pred_check
    _
  $region55: #{illu_generator_forward.1} parent=0 // pred_check_branch
    %1612 = sbr.rel (0) target = $region57
  $region56: #{illu_generator_forward.1} parent=0 // pred_region
    _
  $region57: #{illu_generator_forward.1} parent=0 // pred_fallthru
    _
  // Predicated region
  $region58: #{illu_generator_forward.1} parent=0 // pred_check
    _
  $region59: #{illu_generator_forward.1} parent=0 // pred_check_branch
    %1614 = sbr.rel (0) target = $region61
  $region60: #{illu_generator_forward.1} parent=0 // pred_region
    _
  $region61: #{illu_generator_forward.1} parent=0 // pred_fallthru
    _
  // Predicated region
  $region62: #{illu_generator_forward.1} parent=0 // pred_check
    _
  $region63: #{illu_generator_forward.1} parent=0 // pred_check_branch
    %1616 = sbr.rel (0) target = $region65
  $region64: #{illu_generator_forward.1} parent=0 // pred_region
    _
  $region65: #{illu_generator_forward.1} parent=0 // pred_fallthru
    _
  // Predicated region
  $region66: #{illu_generator_forward.1} parent=0 // pred_check
    _
  $region67: #{illu_generator_forward.1} parent=0 // pred_check_branch
    %1618 = sbr.rel (0) target = $region69
  $region68: #{illu_generator_forward.1} parent=0 // pred_region
    _
  $region69: #{illu_generator_forward.1} parent=0 // pred_fallthru
    _
  // Predicated region
  $region70: #{illu_generator_forward.1} parent=0 // pred_check
    _
  $region71: #{illu_generator_forward.1} parent=0 // pred_check_branch
    %1620 = sbr.rel (0) target = $region73
  $region72: #{illu_generator_forward.1} parent=0 // pred_region
    _
  $region73: #{illu_generator_forward.1} parent=0 // pred_fallthru
    _
  // Predicated region
  $region74: #{illu_generator_forward.1} parent=0 // pred_check
    _
  $region75: #{illu_generator_forward.1} parent=0 // pred_check_branch
    %1622 = sbr.rel (0) target = $region77
  $region76: #{illu_generator_forward.1} parent=0 // pred_region
    _
  $region77: #{illu_generator_forward.1} parent=0 // pred_fallthru
    _
  // Predicated region
  $region78: #{illu_generator_forward.1} parent=0 // pred_check
    _
  $region79: #{illu_generator_forward.1} parent=0 // pred_check_branch
    %1624 = sbr.rel (0) target = $region81
  $region80: #{illu_generator_forward.1} parent=0 // pred_region
    _
  $region81: #{illu_generator_forward.1} parent=0 // pred_fallthru
    _
  // Predicated region
  $region82: #{illu_generator_forward.1} parent=0 // pred_check
    _
  $region83: #{illu_generator_forward.1} parent=0 // pred_check_branch
    %1626 = sbr.rel (0) target = $region85
  $region84: #{illu_generator_forward.1} parent=0 // pred_region
    _
  $region85: #{illu_generator_forward.1} parent=0 // pred_fallthru
    _

</llo_original>
